<compile_context>
chip_gen: v7x
topology: tpu7x:2x2x1
jax: 0.10.0
libtpu: 0.0.40
codegen_flags: <defaults>
</compile_context>

<pallas_src>
import math
import functools

import jax
import jax.numpy as jnp
from jax.experimental import pallas as pl
from jax.experimental.pallas import tpu as pltpu


# ----------------------------------------------------------------------------
# GELU helper (PyTorch nn.GELU default is exact erf).  Probe once whether
# lax.erf lowers through Mosaic; otherwise fall back to the tanh approximation.
# ----------------------------------------------------------------------------
@functools.lru_cache(maxsize=1)
def _erf_supported() -> bool:
    def k(x_ref, o_ref):
        o_ref[...] = jax.lax.erf(x_ref[...])
    try:
        f = pl.pallas_call(k, out_shape=jax.ShapeDtypeStruct((8, 128), jnp.float32))
        jax.block_until_ready(f(jnp.zeros((8, 128), jnp.float32)))
        return True
    except Exception:
        return False


def _gelu(x, exact: bool):
    if exact:
        return 0.5 * x * (1.0 + jax.lax.erf(x * (1.0 / math.sqrt(2.0))))
    # TODO(synk): tanh-approx GELU fallback, used only if exact-erf fails to lower.
    c = math.sqrt(2.0 / math.pi)
    return 0.5 * x * (1.0 + jnp.tanh(c * (x + 0.044715 * x * x * x)))


# ----------------------------------------------------------------------------
# Packed weight slab layout (single (rows, 128) f32 operand).
# Matmul weight sections start at 8-aligned sublane rows; total rows are a
# multiple of 8 and lanes a multiple of 128 so the single DMA is tile-aligned.
# ----------------------------------------------------------------------------
def _slab_layout(D, C, H, P):
    lanes = max(4 * H, C, H, P)
    lanes = ((lanes + 127) // 128) * 128
    off = {}
    r = 0

    def take(name, n, align=1):
        nonlocal r
        r = ((r + align - 1) // align) * align
        off[name] = r
        r += n

    take("cw0", D)          # conv tap t-1   (D, C)
    take("cw1", D)          # conv tap t     (D, C)
    take("cw2", D)          # conv tap t+1   (D, C)
    take("cb", 1)           # conv bias      (1, C)
    take("wih", C, 8)       # W_ih^T         (C, 4H)   (g block pre-scaled x2)
    take("whh", H, 8)       # W_hh^T         (H, 4H)   (g block pre-scaled x2)
    take("bl", 1)           # b_ih + b_hh    (1, 4H)   (g block pre-scaled x2)
    take("w1", H, 8)        # Linear1 W^T    (H, H)
    take("b1", 1)           # Linear1 bias   (1, H)
    take("lng", 1)          # LayerNorm gamma(1, H)
    take("lnb", 1)          # LayerNorm beta (1, H)
    take("b2", 1)           # Linear2 bias   (1, P)
    take("w2", H, 8)        # Linear2 W^T    (H, P)
    rows = ((r + 7) // 8) * 8
    return off, rows, lanes


# ----------------------------------------------------------------------------
# Kernel: single program, whole batch.  Conv + LSTM + output head in-kernel.
#   x_ref : (B, S, D) f32 raw encoder input
#   w_ref : (rows, 128) f32 packed weight slab (see _slab_layout)
#   out   : (B, P) f32
# ----------------------------------------------------------------------------
def _cnn_lstm_kernel(x_ref, w_ref, out_ref, *, batch, seq_len, in_dim,
                     conv_ch, hidden_dim, pred_len, exact_gelu):
    B, S, D, C, H, P = batch, seq_len, in_dim, conv_ch, hidden_dim, pred_len
    L, _, _ = _slab_layout(D, C, H, P)
    f32, bf16 = jnp.float32, jnp.bfloat16
    rows = B * S

    # ---- build shifted conv taps in-kernel (no wrapper-side XLA fusion) -----
    # rows are batch-major: row r = b*S + s.  Shifts are exact 0/1 row-select
    # matmuls (off the serial chain, guaranteed Mosaic-lowerable ops).
    x2 = x_ref[...].reshape(rows, D)                               # (B*S, D) f32
    x2b = x2.astype(bf16)
    r_i = jax.lax.broadcasted_iota(jnp.int32, (rows, rows), 0)
    q_i = jax.lax.broadcasted_iota(jnp.int32, (rows, rows), 1)
    t_r = jax.lax.broadcasted_iota(jnp.int32, (B, S, 1), 1).reshape(rows, 1)
    p_prev = jnp.where((q_i == r_i - 1) & (t_r > 0), 1.0, 0.0).astype(bf16)
    p_next = jnp.where((q_i == r_i + 1) & (t_r < S - 1), 1.0, 0.0).astype(bf16)
    x_prev = jnp.dot(p_prev, x2b, preferred_element_type=f32).astype(bf16)
    x_next = jnp.dot(p_next, x2b, preferred_element_type=f32).astype(bf16)

    # ---- Conv1d(k=3, pad=1) + bias + ReLU: 3 tap matmuls (bf16 MXU operands) -
    cw0 = w_ref[L["cw0"]:L["cw0"] + D, 0:C].astype(bf16)
    cw1 = w_ref[L["cw1"]:L["cw1"] + D, 0:C].astype(bf16)
    cw2 = w_ref[L["cw2"]:L["cw2"] + D, 0:C].astype(bf16)
    cb = w_ref[L["cb"]:L["cb"] + 1, 0:C]                           # f32 bias
    y = (jnp.dot(x_prev, cw0, preferred_element_type=f32)
         + jnp.dot(x2b, cw1, preferred_element_type=f32)
         + jnp.dot(x_next, cw2, preferred_element_type=f32)
         + cb)
    y = jnp.maximum(y, 0.0)                                        # (B*S, C)
    # Dropout = identity at inference.

    # ---- LSTM input projection hoisted out of the recurrence ----------------
    wih = w_ref[L["wih"]:L["wih"] + C, 0:4 * H].astype(bf16)       # g block pre-scaled
    blstm = w_ref[L["bl"]:L["bl"] + 1, 0:4 * H]                    # f32, pre-scaled
    gates_x = (jnp.dot(y.astype(bf16), wih, preferred_element_type=f32)
               + blstm).reshape(B, S, 4 * H)                       # (B, S, 4H)

    whh = w_ref[L["whh"]:L["whh"] + H, 0:4 * H].astype(bf16)       # held across steps

    h = jnp.zeros((B, H), f32)
    c = jnp.zeros((B, H), f32)
    for t in range(S):                                             # static unroll, S=8
        g = gates_x[:, t, :] + jnp.dot(h.astype(bf16), whh,
                                       preferred_element_type=f32)
        s = jax.nn.sigmoid(g)            # one wide EUP region; g block pre-scaled by 2
        i_g = s[:, 0 * H:1 * H]
        f_g = s[:, 1 * H:2 * H]
        g_g = 2.0 * s[:, 2 * H:3 * H] - 1.0                        # = tanh(g block)
        o_g = s[:, 3 * H:4 * H]
        c = f_g * c + i_g * g_g
        h = o_g * jnp.tanh(c)                                      # native tanh

    # ---- output head: Linear -> LayerNorm(eps=1e-5) -> GELU -> Linear -------
    w1 = w_ref[L["w1"]:L["w1"] + H, 0:H].astype(bf16)
    b1 = w_ref[L["b1"]:L["b1"] + 1, 0:H]
    ln_g = w_ref[L["lng"]:L["lng"] + 1, 0:H]
    ln_b = w_ref[L["lnb"]:L["lnb"] + 1, 0:H]
    w2 = w_ref[L["w2"]:L["w2"] + H, 0:P].astype(bf16)
    b2 = w_ref[L["b2"]:L["b2"] + 1, 0:P]

    z = jnp.dot(h.astype(bf16), w1, preferred_element_type=f32) + b1
    mu = jnp.mean(z, axis=-1, keepdims=True)
    var = jnp.mean((z - mu) * (z - mu), axis=-1, keepdims=True)
    z = (z - mu) * jax.lax.rsqrt(var + 1e-5) * ln_g + ln_b
    z = _gelu(z, exact_gelu)
    out = jnp.dot(z.astype(bf16), w2, preferred_element_type=f32) + b2
    out_ref[...] = out.astype(out_ref.dtype)                       # single (B, P) store


# ----------------------------------------------------------------------------
# Wrapper: no per-call data plumbing — x_enc and the packed slab go straight
# into one grid-less pallas_call with whole-array VMEM blocks.
# ----------------------------------------------------------------------------
@functools.partial(jax.jit,
                   static_argnames=("conv_ch", "hidden_dim", "pred_len", "exact_gelu"))
def cnn_lstm_forward(x_enc, slab, *, conv_ch, hidden_dim, pred_len, exact_gelu):
    B, S, D = x_enc.shape
    kernel = functools.partial(_cnn_lstm_kernel, batch=B, seq_len=S, in_dim=D,
                               conv_ch=conv_ch, hidden_dim=hidden_dim,
                               pred_len=pred_len, exact_gelu=exact_gelu)
    vmem = pl.BlockSpec(memory_space=pltpu.MemorySpace.VMEM)
    out = pl.pallas_call(
        kernel,
        out_shape=jax.ShapeDtypeStruct((B, pred_len), jnp.float32),
        in_specs=[vmem, vmem],
        out_specs=vmem,
    )(x_enc, slab)
    return out[:, :, None]                   # unsqueeze(-1) -> (B, pred_len, 1)


# ----------------------------------------------------------------------------
# Deterministic parameter construction (PyTorch-shaped, repacked for kernel)
# ----------------------------------------------------------------------------
def init_params(key, D, C, H, P):
    ks = jax.random.split(key, 10)

    def u(k, shape, fan_in):
        bound = 1.0 / math.sqrt(fan_in)
        return jax.random.uniform(k, shape, jnp.float32, -bound, bound)

    conv_w = u(ks[0], (C, D, 3), D * 3)       # nn.Conv1d weight (C_out, C_in, 3)
    conv_b = u(ks[1], (C,), D * 3)
    w_ih = u(ks[2], (4 * H, C), H)            # nn.LSTM weights (i|f|g|o)
    w_hh = u(ks[3], (4 * H, H), H)
    b_ih = u(ks[4], (4 * H,), H)
    b_hh = u(ks[5], (4 * H,), H)
    w1 = u(ks[6], (H, H), H)                  # nn.Linear(H, H)
    b1 = u(ks[7], (H,), H)
    w2 = u(ks[8], (P, H), H)                  # nn.Linear(H, pred_len)
    b2 = u(ks[9], (P,), H)
    ln_g = jnp.ones((H,), jnp.float32)
    ln_b = jnp.zeros((H,), jnp.float32)

    # ---- KERNEL-ONLY packed slab: one tile-aligned (rows, 128) f32 operand --
    # g-block columns [2H:3H) are pre-scaled by 2 so the kernel's single wide
    # sigmoid yields tanh via 2*sigmoid(2x)-1.  Reference keys stay unscaled.
    off, rows, lanes = _slab_layout(D, C, H, P)
    gscale = jnp.ones((4 * H,), jnp.float32).at[2 * H:3 * H].set(2.0)
    slab = jnp.zeros((rows, lanes), jnp.float32)
    slab = slab.at[off["cw0"]:off["cw0"] + D, :C].set(conv_w[:, :, 0].T)
    slab = slab.at[off["cw1"]:off["cw1"] + D, :C].set(conv_w[:, :, 1].T)
    slab = slab.at[off["cw2"]:off["cw2"] + D, :C].set(conv_w[:, :, 2].T)
    slab = slab.at[off["cb"], :C].set(conv_b)
    slab = slab.at[off["wih"]:off["wih"] + C, :4 * H].set(w_ih.T * gscale)
    slab = slab.at[off["whh"]:off["whh"] + H, :4 * H].set(w_hh.T * gscale)
    slab = slab.at[off["bl"], :4 * H].set((b_ih + b_hh) * gscale)
    slab = slab.at[off["w1"]:off["w1"] + H, :H].set(w1.T)
    slab = slab.at[off["b1"], :H].set(b1)
    slab = slab.at[off["lng"], :H].set(ln_g)
    slab = slab.at[off["lnb"], :H].set(ln_b)
    slab = slab.at[off["b2"], :P].set(b2)
    slab = slab.at[off["w2"]:off["w2"] + H, :P].set(w2.T)

    return {
        "slab": slab,
        # raw (unscaled, f32) pieces kept for the pure-JAX reference
        "conv_w_taps": jnp.transpose(conv_w, (2, 1, 0)),   # (3, D, C)
        "conv_b": conv_b.reshape(1, C),
        "wih_t": w_ih.T,
        "whh_t": w_hh.T,
        "b_lstm": (b_ih + b_hh).reshape(1, 4 * H),
        "w1_t": w1.T,
        "b1": b1.reshape(1, H),
        "ln_g": ln_g.reshape(1, H),
        "ln_b": ln_b.reshape(1, H),
        "w2_t": w2.T,
        "b2": b2.reshape(1, P),
    }


# ----------------------------------------------------------------------------
# Pure-JAX reference (mirrors the PyTorch forward, full f32) for a sanity check
# ----------------------------------------------------------------------------
def reference_forward(x_enc, params, *, exact_gelu):
    B, S, D = x_enc.shape
    convw = params["conv_w_taps"]
    H = params["whh_t"].shape[0]

    xp = jnp.pad(x_enc, ((0, 0), (1, 1), (0, 0)))
    y = (jnp.einsum("bsd,dc->bsc", xp[:, 0:S], convw[0])
         + jnp.einsum("bsd,dc->bsc", xp[:, 1:S + 1], convw[1])
         + jnp.einsum("bsd,dc->bsc", xp[:, 2:S + 2], convw[2])
         + params["conv_b"])
    y = jnp.maximum(y, 0.0)

    def step(carry, x_t):
        h, c = carry
        g = x_t @ params["wih_t"] + h @ params["whh_t"] + params["b_lstm"]
        i = jax.nn.sigmoid(g[:, :H])
        f = jax.nn.sigmoid(g[:, H:2 * H])
        gg = jnp.tanh(g[:, 2 * H:3 * H])
        o = jax.nn.sigmoid(g[:, 3 * H:])
        c = f * c + i * gg
        h = o * jnp.tanh(c)
        return (h, c), None

    h = jnp.zeros((B, H), jnp.float32)
    c = jnp.zeros((B, H), jnp.float32)
    (h, _), _ = jax.lax.scan(step, (h, c), jnp.transpose(y, (1, 0, 2)))

    z = h @ params["w1_t"] + params["b1"]
    mu = z.mean(-1, keepdims=True)
    var = ((z - mu) ** 2).mean(-1, keepdims=True)
    z = (z - mu) * jax.lax.rsqrt(var + 1e-5) * params["ln_g"] + params["ln_b"]
    z = _gelu(z, exact_gelu)
    out = z @ params["w2_t"] + params["b2"]
    return out[:, :, None]


if __name__ == "__main__":
    # config: enc_in=4, seq_len=8, pred_len=4, cnn_out_channels=16, d_model=32
    B, S, D, C, H, P = 2, 8, 4, 16, 32, 4

    key = jax.random.PRNGKey(0)
    kx, kp = jax.random.split(key)
    x_enc = jax.random.normal(kx, (B, S, D), jnp.float32)
    params = init_params(kp, D, C, H, P)

    exact = _erf_supported()          # one-time probe, outside the hot path

    out = jax.block_until_ready(
        cnn_lstm_forward(x_enc, params["slab"], conv_ch=C, hidden_dim=H,
                         pred_len=P, exact_gelu=exact))
    ref = reference_forward(x_enc, params, exact_gelu=exact)

    assert out.shape == (B, P, 1), out.shape
    # Kernel uses bf16 MXU operands (f32 accumulation); reference is full f32,
    # so the tolerance accounts for bf16 operand rounding through the 8-step LSTM.
    assert jnp.allclose(out, ref, atol=5e-2, rtol=5e-2), (out, ref)

    print("KERNEL_OK")
</pallas_src>

<mosaic_0001>
module attributes {stable_mosaic.version = 11 : i64} {
  func.func @k(%arg0: memref<8x128xf32, #tpu.memory_space<vmem>>, %arg1: memref<8x128xf32, #tpu.memory_space<vmem>>) attributes {dimension_semantics = [], scalar_prefetch = 0 : i64, scratch_operands = 0 : i64, tpu.core_type = #tpu.core_type<tc>} {
    %c0 = arith.constant 0 : index
    %c0_0 = arith.constant 0 : index
    %0 = vector.load %arg0[%c0, %c0_0] : memref<8x128xf32, #tpu.memory_space<vmem>>, vector<8x128xf32>
    %1 = math.erf %0 : vector<8x128xf32>
    %c0_1 = arith.constant 0 : index
    %c0_2 = arith.constant 0 : index
    %2 = vector.load %arg1[%c0_1, %c0_2] : memref<8x128xf32, #tpu.memory_space<vmem>>, vector<8x128xf32>
    tpu.vector_store %arg1[%c0_1, %c0_2], %1 {strides = array<i32>} : memref<8x128xf32, #tpu.memory_space<vmem>>, vector<8x128xf32>,
    return
  }
}

module attributes {stable_mosaic.version = 11 : i64} {
  func.func @_cnn_lstm_kernel(%arg0: memref<2x8x4xf32, #tpu.memory_space<vmem>>, %arg1: memref<144x128xf32, #tpu.memory_space<vmem>>, %arg2: memref<2x4xf32, #tpu.memory_space<vmem>>) attributes {dimension_semantics = [], scalar_prefetch = 0 : i64, scratch_operands = 0 : i64, tpu.core_type = #tpu.core_type<tc>} {
    %c0 = arith.constant 0 : index
    %c0_0 = arith.constant 0 : index
    %c0_1 = arith.constant 0 : index
    %0 = vector.load %arg0[%c0, %c0_0, %c0_1] : memref<2x8x4xf32, #tpu.memory_space<vmem>>, vector<2x8x4xf32>
    %1 = vector.shape_cast %0 : vector<2x8x4xf32> to vector<16x4xf32>
    %2 = arith.truncf %1 : vector<16x4xf32> to vector<16x4xbf16>
    %3 = tpu.iota {dimensions = array<i32: 0>} : vector<16x16xi32>
    %4 = tpu.iota {dimensions = array<i32: 1>} : vector<16x16xi32>
    %5 = tpu.iota {dimensions = array<i32: 1>} : vector<2x8x1xi32>
    %6 = vector.shape_cast %5 : vector<2x8x1xi32> to vector<16x1xi32>
    %c1_i32 = arith.constant 1 : i32
    %7 = vector.broadcast %c1_i32 : i32 to vector<16x16xi32>
    %8 = arith.subi %3, %7 : vector<16x16xi32>
    %9 = arith.cmpi eq, %4, %8 : vector<16x16xi32>
    %c0_i32 = arith.constant 0 : i32
    %10 = vector.broadcast %c0_i32 : i32 to vector<16x1xi32>
    %11 = arith.cmpi sgt, %6, %10 : vector<16x1xi32>
    %12 = vector.broadcast %11 : vector<16x1xi1> to vector<16x16xi1>
    %13 = arith.andi %9, %12 : vector<16x16xi1>
    %cst = arith.constant 1.000000e+00 : f32
    %cst_2 = arith.constant 0.000000e+00 : f32
    %14 = vector.broadcast %cst : f32 to vector<16x16xf32>
    %15 = vector.broadcast %cst_2 : f32 to vector<16x16xf32>
    %16 = arith.select %13, %14, %15 : vector<16x16xi1>, vector<16x16xf32>
    %17 = arith.truncf %16 : vector<16x16xf32> to vector<16x16xbf16>
    %c1_i32_3 = arith.constant 1 : i32
    %18 = vector.broadcast %c1_i32_3 : i32 to vector<16x16xi32>
    %19 = arith.addi %3, %18 : vector<16x16xi32>
    %20 = arith.cmpi eq, %4, %19 : vector<16x16xi32>
    %c7_i32 = arith.constant 7 : i32
    %21 = vector.broadcast %c7_i32 : i32 to vector<16x1xi32>
    %22 = arith.cmpi slt, %6, %21 : vector<16x1xi32>
    %23 = vector.broadcast %22 : vector<16x1xi1> to vector<16x16xi1>
    %24 = arith.andi %20, %23 : vector<16x16xi1>
    %cst_4 = arith.constant 1.000000e+00 : f32
    %cst_5 = arith.constant 0.000000e+00 : f32
    %25 = vector.broadcast %cst_4 : f32 to vector<16x16xf32>
    %26 = vector.broadcast %cst_5 : f32 to vector<16x16xf32>
    %27 = arith.select %24, %25, %26 : vector<16x16xi1>, vector<16x16xf32>
    %28 = arith.truncf %27 : vector<16x16xf32> to vector<16x16xbf16>
    %cst_6 = arith.constant dense<0.000000e+00> : vector<16x4xf32>
    %29 = tpu.matmul %17, %2, %cst_6 {dimension_numbers = #tpu.dot_dimension_numbers<[1], [0], [0], [1], [0, 0, 1, 1], [], []>} : vector<16x16xbf16>, vector<16x4xbf16>, vector<16x4xf32> -> vector<16x4xf32>
    %30 = arith.truncf %29 : vector<16x4xf32> to vector<16x4xbf16>
    %cst_7 = arith.constant dense<0.000000e+00> : vector<16x4xf32>
    %31 = tpu.matmul %28, %2, %cst_7 {dimension_numbers = #tpu.dot_dimension_numbers<[1], [0], [0], [1], [0, 0, 1, 1], [], []>} : vector<16x16xbf16>, vector<16x4xbf16>, vector<16x4xf32> -> vector<16x4xf32>
    %32 = arith.truncf %31 : vector<16x4xf32> to vector<16x4xbf16>
    %c0_8 = arith.constant 0 : index
    %c0_9 = arith.constant 0 : index
    %33 = vector.load %arg1[%c0_8, %c0_9] : memref<144x128xf32, #tpu.memory_space<vmem>>, vector<4x16xf32>
    %34 = arith.truncf %33 : vector<4x16xf32> to vector<4x16xbf16>
    %c4 = arith.constant 4 : index
    %c0_10 = arith.constant 0 : index
    %35 = vector.load %arg1[%c4, %c0_10] : memref<144x128xf32, #tpu.memory_space<vmem>>, vector<4x16xf32>
    %36 = arith.truncf %35 : vector<4x16xf32> to vector<4x16xbf16>
    %c8 = arith.constant 8 : index
    %c0_11 = arith.constant 0 : index
    %37 = vector.load %arg1[%c8, %c0_11] : memref<144x128xf32, #tpu.memory_space<vmem>>, vector<4x16xf32>
    %38 = arith.truncf %37 : vector<4x16xf32> to vector<4x16xbf16>
    %c12 = arith.constant 12 : index
    %c0_12 = arith.constant 0 : index
    %39 = vector.load %arg1[%c12, %c0_12] : memref<144x128xf32, #tpu.memory_space<vmem>>, vector<1x16xf32>
    %cst_13 = arith.constant dense<0.000000e+00> : vector<16x16xf32>
    %40 = tpu.matmul %30, %34, %cst_13 {dimension_numbers = #tpu.dot_dimension_numbers<[1], [0], [0], [1], [0, 0, 1, 1], [], []>} : vector<16x4xbf16>, vector<4x16xbf16>, vector<16x16xf32> -> vector<16x16xf32>
    %cst_14 = arith.constant dense<0.000000e+00> : vector<16x16xf32>
    %41 = tpu.matmul %2, %36, %cst_14 {dimension_numbers = #tpu.dot_dimension_numbers<[1], [0], [0], [1], [0, 0, 1, 1], [], []>} : vector<16x4xbf16>, vector<4x16xbf16>, vector<16x16xf32> -> vector<16x16xf32>
    %42 = arith.addf %40, %41 : vector<16x16xf32>
    %cst_15 = arith.constant dense<0.000000e+00> : vector<16x16xf32>
    %43 = tpu.matmul %32, %38, %cst_15 {dimension_numbers = #tpu.dot_dimension_numbers<[1], [0], [0], [1], [0, 0, 1, 1], [], []>} : vector<16x4xbf16>, vector<4x16xbf16>, vector<16x16xf32> -> vector<16x16xf32>
    %44 = arith.addf %42, %43 : vector<16x16xf32>
    %45 = vector.broadcast %39 : vector<1x16xf32> to vector<16x16xf32>
    %46 = arith.addf %44, %45 : vector<16x16xf32>
    %cst_16 = arith.constant 0.000000e+00 : f32
    %47 = vector.broadcast %cst_16 : f32 to vector<16x16xf32>
    %48 = arith.maximumf %46, %47 : vector<16x16xf32>
    %c16 = arith.constant 16 : index
    %c0_17 = arith.constant 0 : index
    %49 = vector.load %arg1[%c16, %c0_17] : memref<144x128xf32, #tpu.memory_space<vmem>>, vector<16x128xf32>
    %50 = arith.truncf %49 : vector<16x128xf32> to vector<16x128xbf16>
    %c64 = arith.constant 64 : index
    %c0_18 = arith.constant 0 : index
    %51 = vector.load %arg1[%c64, %c0_18] : memref<144x128xf32, #tpu.memory_space<vmem>>, vector<1x128xf32>
    %52 = arith.truncf %48 : vector<16x16xf32> to vector<16x16xbf16>
    %cst_19 = arith.constant dense<0.000000e+00> : vector<16x128xf32>
    %53 = tpu.matmul %52, %50, %cst_19 {dimension_numbers = #tpu.dot_dimension_numbers<[1], [0], [0], [1], [0, 0, 1, 1], [], []>} : vector<16x16xbf16>, vector<16x128xbf16>, vector<16x128xf32> -> vector<16x128xf32>
    %54 = vector.broadcast %51 : vector<1x128xf32> to vector<16x128xf32>
    %55 = arith.addf %53, %54 : vector<16x128xf32>
    %56 = vector.shape_cast %55 : vector<16x128xf32> to vector<2x8x128xf32>
    %c32 = arith.constant 32 : index
    %c0_20 = arith.constant 0 : index
    %57 = vector.load %arg1[%c32, %c0_20] : memref<144x128xf32, #tpu.memory_space<vmem>>, vector<32x128xf32>
    %58 = arith.truncf %57 : vector<32x128xf32> to vector<32x128xbf16>
    %cst_21 = arith.constant 0.000000e+00 : f32
    %59 = vector.broadcast %cst_21 : f32 to vector<2x32xf32>
    %cst_22 = arith.constant 0.000000e+00 : f32
    %60 = vector.broadcast %cst_22 : f32 to vector<2x32xf32>
    %61 = vector.extract_strided_slice %56 {offsets = [0, 0, 0], sizes = [2, 1, 128], strides = [1, 1, 1]} : vector<2x8x128xf32> to vector<2x1x128xf32>
    %62 = vector.shape_cast %61 : vector<2x1x128xf32> to vector<2x128xf32>
    %63 = arith.truncf %59 : vector<2x32xf32> to vector<2x32xbf16>
    %cst_23 = arith.constant dense<0.000000e+00> : vector<2x128xf32>
    %64 = tpu.matmul %63, %58, %cst_23 {dimension_numbers = #tpu.dot_dimension_numbers<[1], [0], [0], [1], [0, 0, 1, 1], [], []>} : vector<2x32xbf16>, vector<32x128xbf16>, vector<2x128xf32> -> vector<2x128xf32>
    %65 = arith.addf %62, %64 : vector<2x128xf32>
    %66 = arith.negf %65 : vector<2x128xf32>
    %67 = math.exp %66 : vector<2x128xf32>
    %cst_24 = arith.constant 1.000000e+00 : f32
    %68 = vector.broadcast %cst_24 : f32 to vector<2x128xf32>
    %69 = arith.addf %68, %67 : vector<2x128xf32>
    %70 = arith.divf %68, %69 : vector<2x128xf32>
    %71 = vector.extract_strided_slice %70 {offsets = [0, 0], sizes = [2, 32], strides = [1, 1]} : vector<2x128xf32> to vector<2x32xf32>
    %72 = vector.extract_strided_slice %70 {offsets = [0, 32], sizes = [2, 32], strides = [1, 1]} : vector<2x128xf32> to vector<2x32xf32>
    %73 = vector.extract_strided_slice %70 {offsets = [0, 64], sizes = [2, 32], strides = [1, 1]} : vector<2x128xf32> to vector<2x32xf32>
    %cst_25 = arith.constant 2.000000e+00 : f32
    %74 = vector.broadcast %cst_25 : f32 to vector<2x32xf32>
    %75 = arith.mulf %74, %73 : vector<2x32xf32>
    %cst_26 = arith.constant 1.000000e+00 : f32
    %76 = vector.broadcast %cst_26 : f32 to vector<2x32xf32>
    %77 = arith.subf %75, %76 : vector<2x32xf32>
    %78 = vector.extract_strided_slice %70 {offsets = [0, 96], sizes = [2, 32], strides = [1, 1]} : vector<2x128xf32> to vector<2x32xf32>
    %79 = arith.mulf %72, %60 : vector<2x32xf32>
    %80 = arith.mulf %71, %77 : vector<2x32xf32>
    %81 = arith.addf %79, %80 : vector<2x32xf32>
    %82 = math.tanh %81 : vector<2x32xf32>
    %83 = arith.mulf %78, %82 : vector<2x32xf32>
    %84 = vector.extract_strided_slice %56 {offsets = [0, 1, 0], sizes = [2, 1, 128], strides = [1, 1, 1]} : vector<2x8x128xf32> to vector<2x1x128xf32>
    %85 = vector.shape_cast %84 : vector<2x1x128xf32> to vector<2x128xf32>
    %86 = arith.truncf %83 : vector<2x32xf32> to vector<2x32xbf16>
    %cst_27 = arith.constant dense<0.000000e+00> : vector<2x128xf32>
    %87 = tpu.matmul %86, %58, %cst_27 {dimension_numbers = #tpu.dot_dimension_numbers<[1], [0], [0], [1], [0, 0, 1, 1], [], []>} : vector<2x32xbf16>, vector<32x128xbf16>, vector<2x128xf32> -> vector<2x128xf32>
    %88 = arith.addf %85, %87 : vector<2x128xf32>
    %89 = arith.negf %88 : vector<2x128xf32>
    %90 = math.exp %89 : vector<2x128xf32>
    %cst_28 = arith.constant 1.000000e+00 : f32
    %91 = vector.broadcast %cst_28 : f32 to vector<2x128xf32>
    %92 = arith.addf %91, %90 : vector<2x128xf32>
    %93 = arith.divf %91, %92 : vector<2x128xf32>
    %94 = vector.extract_strided_slice %93 {offsets = [0, 0], sizes = [2, 32], strides = [1, 1]} : vector<2x128xf32> to vector<2x32xf32>
    %95 = vector.extract_strided_slice %93 {offsets = [0, 32], sizes = [2, 32], strides = [1, 1]} : vector<2x128xf32> to vector<2x32xf32>
    %96 = vector.extract_strided_slice %93 {offsets = [0, 64], sizes = [2, 32], strides = [1, 1]} : vector<2x128xf32> to vector<2x32xf32>
    %cst_29 = arith.constant 2.000000e+00 : f32
    %97 = vector.broadcast %cst_29 : f32 to vector<2x32xf32>
    %98 = arith.mulf %97, %96 : vector<2x32xf32>
    %cst_30 = arith.constant 1.000000e+00 : f32
    %99 = vector.broadcast %cst_30 : f32 to vector<2x32xf32>
    %100 = arith.subf %98, %99 : vector<2x32xf32>
    %101 = vector.extract_strided_slice %93 {offsets = [0, 96], sizes = [2, 32], strides = [1, 1]} : vector<2x128xf32> to vector<2x32xf32>
    %102 = arith.mulf %95, %81 : vector<2x32xf32>
    %103 = arith.mulf %94, %100 : vector<2x32xf32>
    %104 = arith.addf %102, %103 : vector<2x32xf32>
    %105 = math.tanh %104 : vector<2x32xf32>
    %106 = arith.mulf %101, %105 : vector<2x32xf32>
    %107 = vector.extract_strided_slice %56 {offsets = [0, 2, 0], sizes = [2, 1, 128], strides = [1, 1, 1]} : vector<2x8x128xf32> to vector<2x1x128xf32>
    %108 = vector.shape_cast %107 : vector<2x1x128xf32> to vector<2x128xf32>
    %109 = arith.truncf %106 : vector<2x32xf32> to vector<2x32xbf16>
    %cst_31 = arith.constant dense<0.000000e+00> : vector<2x128xf32>
    %110 = tpu.matmul %109, %58, %cst_31 {dimension_numbers = #tpu.dot_dimension_numbers<[1], [0], [0], [1], [0, 0, 1, 1], [], []>} : vector<2x32xbf16>, vector<32x128xbf16>, vector<2x128xf32> -> vector<2x128xf32>
    %111 = arith.addf %108, %110 : vector<2x128xf32>
    %112 = arith.negf %111 : vector<2x128xf32>
    %113 = math.exp %112 : vector<2x128xf32>
    %cst_32 = arith.constant 1.000000e+00 : f32
    %114 = vector.broadcast %cst_32 : f32 to vector<2x128xf32>
    %115 = arith.addf %114, %113 : vector<2x128xf32>
    %116 = arith.divf %114, %115 : vector<2x128xf32>
    %117 = vector.extract_strided_slice %116 {offsets = [0, 0], sizes = [2, 32], strides = [1, 1]} : vector<2x128xf32> to vector<2x32xf32>
    %118 = vector.extract_strided_slice %116 {offsets = [0, 32], sizes = [2, 32], strides = [1, 1]} : vector<2x128xf32> to vector<2x32xf32>
    %119 = vector.extract_strided_slice %116 {offsets = [0, 64], sizes = [2, 32], strides = [1, 1]} : vector<2x128xf32> to vector<2x32xf32>
    %cst_33 = arith.constant 2.000000e+00 : f32
    %120 = vector.broadcast %cst_33 : f32 to vector<2x32xf32>
    %121 = arith.mulf %120, %119 : vector<2x32xf32>
    %cst_34 = arith.constant 1.000000e+00 : f32
    %122 = vector.broadcast %cst_34 : f32 to vector<2x32xf32>
    %123 = arith.subf %121, %122 : vector<2x32xf32>
    %124 = vector.extract_strided_slice %116 {offsets = [0, 96], sizes = [2, 32], strides = [1, 1]} : vector<2x128xf32> to vector<2x32xf32>
    %125 = arith.mulf %118, %104 : vector<2x32xf32>
    %126 = arith.mulf %117, %123 : vector<2x32xf32>
    %127 = arith.addf %125, %126 : vector<2x32xf32>
    %128 = math.tanh %127 : vector<2x32xf32>
    %129 = arith.mulf %124, %128 : vector<2x32xf32>
    %130 = vector.extract_strided_slice %56 {offsets = [0, 3, 0], sizes = [2, 1, 128], strides = [1, 1, 1]} : vector<2x8x128xf32> to vector<2x1x128xf32>
    %131 = vector.shape_cast %130 : vector<2x1x128xf32> to vector<2x128xf32>
    %132 = arith.truncf %129 : vector<2x32xf32> to vector<2x32xbf16>
    %cst_35 = arith.constant dense<0.000000e+00> : vector<2x128xf32>
    %133 = tpu.matmul %132, %58, %cst_35 {dimension_numbers = #tpu.dot_dimension_numbers<[1], [0], [0], [1], [0, 0, 1, 1], [], []>} : vector<2x32xbf16>, vector<32x128xbf16>, vector<2x128xf32> -> vector<2x128xf32>
    %134 = arith.addf %131, %133 : vector<2x128xf32>
    %135 = arith.negf %134 : vector<2x128xf32>
    %136 = math.exp %135 : vector<2x128xf32>
    %cst_36 = arith.constant 1.000000e+00 : f32
    %137 = vector.broadcast %cst_36 : f32 to vector<2x128xf32>
    %138 = arith.addf %137, %136 : vector<2x128xf32>
    %139 = arith.divf %137, %138 : vector<2x128xf32>
    %140 = vector.extract_strided_slice %139 {offsets = [0, 0], sizes = [2, 32], strides = [1, 1]} : vector<2x128xf32> to vector<2x32xf32>
    %141 = vector.extract_strided_slice %139 {offsets = [0, 32], sizes = [2, 32], strides = [1, 1]} : vector<2x128xf32> to vector<2x32xf32>
    %142 = vector.extract_strided_slice %139 {offsets = [0, 64], sizes = [2, 32], strides = [1, 1]} : vector<2x128xf32> to vector<2x32xf32>
    %cst_37 = arith.constant 2.000000e+00 : f32
    %143 = vector.broadcast %cst_37 : f32 to vector<2x32xf32>
    %144 = arith.mulf %143, %142 : vector<2x32xf32>
    %cst_38 = arith.constant 1.000000e+00 : f32
    %145 = vector.broadcast %cst_38 : f32 to vector<2x32xf32>
    %146 = arith.subf %144, %145 : vector<2x32xf32>
    %147 = vector.extract_strided_slice %139 {offsets = [0, 96], sizes = [2, 32], strides = [1, 1]} : vector<2x128xf32> to vector<2x32xf32>
    %148 = arith.mulf %141, %127 : vector<2x32xf32>
    %149 = arith.mulf %140, %146 : vector<2x32xf32>
    %150 = arith.addf %148, %149 : vector<2x32xf32>
    %151 = math.tanh %150 : vector<2x32xf32>
    %152 = arith.mulf %147, %151 : vector<2x32xf32>
    %153 = vector.extract_strided_slice %56 {offsets = [0, 4, 0], sizes = [2, 1, 128], strides = [1, 1, 1]} : vector<2x8x128xf32> to vector<2x1x128xf32>
    %154 = vector.shape_cast %153 : vector<2x1x128xf32> to vector<2x128xf32>
    %155 = arith.truncf %152 : vector<2x32xf32> to vector<2x32xbf16>
    %cst_39 = arith.constant dense<0.000000e+00> : vector<2x128xf32>
    %156 = tpu.matmul %155, %58, %cst_39 {dimension_numbers = #tpu.dot_dimension_numbers<[1], [0], [0], [1], [0, 0, 1, 1], [], []>} : vector<2x32xbf16>, vector<32x128xbf16>, vector<2x128xf32> -> vector<2x128xf32>
    %157 = arith.addf %154, %156 : vector<2x128xf32>
    %158 = arith.negf %157 : vector<2x128xf32>
    %159 = math.exp %158 : vector<2x128xf32>
    %cst_40 = arith.constant 1.000000e+00 : f32
    %160 = vector.broadcast %cst_40 : f32 to vector<2x128xf32>
    %161 = arith.addf %160, %159 : vector<2x128xf32>
    %162 = arith.divf %160, %161 : vector<2x128xf32>
    %163 = vector.extract_strided_slice %162 {offsets = [0, 0], sizes = [2, 32], strides = [1, 1]} : vector<2x128xf32> to vector<2x32xf32>
    %164 = vector.extract_strided_slice %162 {offsets = [0, 32], sizes = [2, 32], strides = [1, 1]} : vector<2x128xf32> to vector<2x32xf32>
    %165 = vector.extract_strided_slice %162 {offsets = [0, 64], sizes = [2, 32], strides = [1, 1]} : vector<2x128xf32> to vector<2x32xf32>
    %cst_41 = arith.constant 2.000000e+00 : f32
    %166 = vector.broadcast %cst_41 : f32 to vector<2x32xf32>
    %167 = arith.mulf %166, %165 : vector<2x32xf32>
    %cst_42 = arith.constant 1.000000e+00 : f32
    %168 = vector.broadcast %cst_42 : f32 to vector<2x32xf32>
    %169 = arith.subf %167, %168 : vector<2x32xf32>
    %170 = vector.extract_strided_slice %162 {offsets = [0, 96], sizes = [2, 32], strides = [1, 1]} : vector<2x128xf32> to vector<2x32xf32>
    %171 = arith.mulf %164, %150 : vector<2x32xf32>
    %172 = arith.mulf %163, %169 : vector<2x32xf32>
    %173 = arith.addf %171, %172 : vector<2x32xf32>
    %174 = math.tanh %173 : vector<2x32xf32>
    %175 = arith.mulf %170, %174 : vector<2x32xf32>
    %176 = vector.extract_strided_slice %56 {offsets = [0, 5, 0], sizes = [2, 1, 128], strides = [1, 1, 1]} : vector<2x8x128xf32> to vector<2x1x128xf32>
    %177 = vector.shape_cast %176 : vector<2x1x128xf32> to vector<2x128xf32>
    %178 = arith.truncf %175 : vector<2x32xf32> to vector<2x32xbf16>
    %cst_43 = arith.constant dense<0.000000e+00> : vector<2x128xf32>
    %179 = tpu.matmul %178, %58, %cst_43 {dimension_numbers = #tpu.dot_dimension_numbers<[1], [0], [0], [1], [0, 0, 1, 1], [], []>} : vector<2x32xbf16>, vector<32x128xbf16>, vector<2x128xf32> -> vector<2x128xf32>
    %180 = arith.addf %177, %179 : vector<2x128xf32>
    %181 = arith.negf %180 : vector<2x128xf32>
    %182 = math.exp %181 : vector<2x128xf32>
    %cst_44 = arith.constant 1.000000e+00 : f32
    %183 = vector.broadcast %cst_44 : f32 to vector<2x128xf32>
    %184 = arith.addf %183, %182 : vector<2x128xf32>
    %185 = arith.divf %183, %184 : vector<2x128xf32>
    %186 = vector.extract_strided_slice %185 {offsets = [0, 0], sizes = [2, 32], strides = [1, 1]} : vector<2x128xf32> to vector<2x32xf32>
    %187 = vector.extract_strided_slice %185 {offsets = [0, 32], sizes = [2, 32], strides = [1, 1]} : vector<2x128xf32> to vector<2x32xf32>
    %188 = vector.extract_strided_slice %185 {offsets = [0, 64], sizes = [2, 32], strides = [1, 1]} : vector<2x128xf32> to vector<2x32xf32>
    %cst_45 = arith.constant 2.000000e+00 : f32
    %189 = vector.broadcast %cst_45 : f32 to vector<2x32xf32>
    %190 = arith.mulf %189, %188 : vector<2x32xf32>
    %cst_46 = arith.constant 1.000000e+00 : f32
    %191 = vector.broadcast %cst_46 : f32 to vector<2x32xf32>
    %192 = arith.subf %190, %191 : vector<2x32xf32>
    %193 = vector.extract_strided_slice %185 {offsets = [0, 96], sizes = [2, 32], strides = [1, 1]} : vector<2x128xf32> to vector<2x32xf32>
    %194 = arith.mulf %187, %173 : vector<2x32xf32>
    %195 = arith.mulf %186, %192 : vector<2x32xf32>
    %196 = arith.addf %194, %195 : vector<2x32xf32>
    %197 = math.tanh %196 : vector<2x32xf32>
    %198 = arith.mulf %193, %197 : vector<2x32xf32>
    %199 = vector.extract_strided_slice %56 {offsets = [0, 6, 0], sizes = [2, 1, 128], strides = [1, 1, 1]} : vector<2x8x128xf32> to vector<2x1x128xf32>
    %200 = vector.shape_cast %199 : vector<2x1x128xf32> to vector<2x128xf32>
    %201 = arith.truncf %198 : vector<2x32xf32> to vector<2x32xbf16>
    %cst_47 = arith.constant dense<0.000000e+00> : vector<2x128xf32>
    %202 = tpu.matmul %201, %58, %cst_47 {dimension_numbers = #tpu.dot_dimension_numbers<[1], [0], [0], [1], [0, 0, 1, 1], [], []>} : vector<2x32xbf16>, vector<32x128xbf16>, vector<2x128xf32> -> vector<2x128xf32>
    %203 = arith.addf %200, %202 : vector<2x128xf32>
    %204 = arith.negf %203 : vector<2x128xf32>
    %205 = math.exp %204 : vector<2x128xf32>
    %cst_48 = arith.constant 1.000000e+00 : f32
    %206 = vector.broadcast %cst_48 : f32 to vector<2x128xf32>
    %207 = arith.addf %206, %205 : vector<2x128xf32>
    %208 = arith.divf %206, %207 : vector<2x128xf32>
    %209 = vector.extract_strided_slice %208 {offsets = [0, 0], sizes = [2, 32], strides = [1, 1]} : vector<2x128xf32> to vector<2x32xf32>
    %210 = vector.extract_strided_slice %208 {offsets = [0, 32], sizes = [2, 32], strides = [1, 1]} : vector<2x128xf32> to vector<2x32xf32>
    %211 = vector.extract_strided_slice %208 {offsets = [0, 64], sizes = [2, 32], strides = [1, 1]} : vector<2x128xf32> to vector<2x32xf32>
    %cst_49 = arith.constant 2.000000e+00 : f32
    %212 = vector.broadcast %cst_49 : f32 to vector<2x32xf32>
    %213 = arith.mulf %212, %211 : vector<2x32xf32>
    %cst_50 = arith.constant 1.000000e+00 : f32
    %214 = vector.broadcast %cst_50 : f32 to vector<2x32xf32>
    %215 = arith.subf %213, %214 : vector<2x32xf32>
    %216 = vector.extract_strided_slice %208 {offsets = [0, 96], sizes = [2, 32], strides = [1, 1]} : vector<2x128xf32> to vector<2x32xf32>
    %217 = arith.mulf %210, %196 : vector<2x32xf32>
    %218 = arith.mulf %209, %215 : vector<2x32xf32>
    %219 = arith.addf %217, %218 : vector<2x32xf32>
    %220 = math.tanh %219 : vector<2x32xf32>
    %221 = arith.mulf %216, %220 : vector<2x32xf32>
    %222 = vector.extract_strided_slice %56 {offsets = [0, 7, 0], sizes = [2, 1, 128], strides = [1, 1, 1]} : vector<2x8x128xf32> to vector<2x1x128xf32>
    %223 = vector.shape_cast %222 : vector<2x1x128xf32> to vector<2x128xf32>
    %224 = arith.truncf %221 : vector<2x32xf32> to vector<2x32xbf16>
    %cst_51 = arith.constant dense<0.000000e+00> : vector<2x128xf32>
    %225 = tpu.matmul %224, %58, %cst_51 {dimension_numbers = #tpu.dot_dimension_numbers<[1], [0], [0], [1], [0, 0, 1, 1], [], []>} : vector<2x32xbf16>, vector<32x128xbf16>, vector<2x128xf32> -> vector<2x128xf32>
    %226 = arith.addf %223, %225 : vector<2x128xf32>
    %227 = arith.negf %226 : vector<2x128xf32>
    %228 = math.exp %227 : vector<2x128xf32>
    %cst_52 = arith.constant 1.000000e+00 : f32
    %229 = vector.broadcast %cst_52 : f32 to vector<2x128xf32>
    %230 = arith.addf %229, %228 : vector<2x128xf32>
    %231 = arith.divf %229, %230 : vector<2x128xf32>
    %232 = vector.extract_strided_slice %231 {offsets = [0, 0], sizes = [2, 32], strides = [1, 1]} : vector<2x128xf32> to vector<2x32xf32>
    %233 = vector.extract_strided_slice %231 {offsets = [0, 32], sizes = [2, 32], strides = [1, 1]} : vector<2x128xf32> to vector<2x32xf32>
    %234 = vector.extract_strided_slice %231 {offsets = [0, 64], sizes = [2, 32], strides = [1, 1]} : vector<2x128xf32> to vector<2x32xf32>
    %cst_53 = arith.constant 2.000000e+00 : f32
    %235 = vector.broadcast %cst_53 : f32 to vector<2x32xf32>
    %236 = arith.mulf %235, %234 : vector<2x32xf32>
    %cst_54 = arith.constant 1.000000e+00 : f32
    %237 = vector.broadcast %cst_54 : f32 to vector<2x32xf32>
    %238 = arith.subf %236, %237 : vector<2x32xf32>
    %239 = vector.extract_strided_slice %231 {offsets = [0, 96], sizes = [2, 32], strides = [1, 1]} : vector<2x128xf32> to vector<2x32xf32>
    %240 = arith.mulf %233, %219 : vector<2x32xf32>
    %241 = arith.mulf %232, %238 : vector<2x32xf32>
    %242 = arith.addf %240, %241 : vector<2x32xf32>
    %243 = math.tanh %242 : vector<2x32xf32>
    %244 = arith.mulf %239, %243 : vector<2x32xf32>
    %c72 = arith.constant 72 : index
    %c0_55 = arith.constant 0 : index
    %245 = vector.load %arg1[%c72, %c0_55] : memref<144x128xf32, #tpu.memory_space<vmem>>, vector<32x32xf32>
    %246 = arith.truncf %245 : vector<32x32xf32> to vector<32x32xbf16>
    %c104 = arith.constant 104 : index
    %c0_56 = arith.constant 0 : index
    %247 = vector.load %arg1[%c104, %c0_56] : memref<144x128xf32, #tpu.memory_space<vmem>>, vector<1x32xf32>
    %c105 = arith.constant 105 : index
    %c0_57 = arith.constant 0 : index
    %248 = vector.load %arg1[%c105, %c0_57] : memref<144x128xf32, #tpu.memory_space<vmem>>, vector<1x32xf32>
    %c106 = arith.constant 106 : index
    %c0_58 = arith.constant 0 : index
    %249 = vector.load %arg1[%c106, %c0_58] : memref<144x128xf32, #tpu.memory_space<vmem>>, vector<1x32xf32>
    %c112 = arith.constant 112 : index
    %c0_59 = arith.constant 0 : index
    %250 = vector.load %arg1[%c112, %c0_59] : memref<144x128xf32, #tpu.memory_space<vmem>>, vector<32x4xf32>
    %251 = arith.truncf %250 : vector<32x4xf32> to vector<32x4xbf16>
    %c107 = arith.constant 107 : index
    %c0_60 = arith.constant 0 : index
    %252 = vector.load %arg1[%c107, %c0_60] : memref<144x128xf32, #tpu.memory_space<vmem>>, vector<1x4xf32>
    %253 = arith.truncf %244 : vector<2x32xf32> to vector<2x32xbf16>
    %cst_61 = arith.constant dense<0.000000e+00> : vector<2x32xf32>
    %254 = tpu.matmul %253, %246, %cst_61 {dimension_numbers = #tpu.dot_dimension_numbers<[1], [0], [0], [1], [0, 0, 1, 1], [], []>} : vector<2x32xbf16>, vector<32x32xbf16>, vector<2x32xf32> -> vector<2x32xf32>
    %255 = vector.broadcast %247 : vector<1x32xf32> to vector<2x32xf32>
    %256 = arith.addf %254, %255 : vector<2x32xf32>
    %cst_62 = arith.constant dense<0.000000e+00> : vector<2xf32>
    %257 = vector.multi_reduction <add>, %256, %cst_62 [1] : vector<2x32xf32> to vector<2xf32>
    %258 = vector.shape_cast %257 : vector<2xf32> to vector<2x1xf32>
    %cst_63 = arith.constant 3.200000e+01 : f32
    %259 = vector.broadcast %cst_63 : f32 to vector<2x1xf32>
    %260 = arith.divf %258, %259 : vector<2x1xf32>
    %261 = vector.broadcast %260 : vector<2x1xf32> to vector<2x32xf32>
    %262 = arith.subf %256, %261 : vector<2x32xf32>
    %263 = vector.broadcast %260 : vector<2x1xf32> to vector<2x32xf32>
    %264 = arith.subf %256, %263 : vector<2x32xf32>
    %265 = arith.mulf %262, %264 : vector<2x32xf32>
    %cst_64 = arith.constant dense<0.000000e+00> : vector<2xf32>
    %266 = vector.multi_reduction <add>, %265, %cst_64 [1] : vector<2x32xf32> to vector<2xf32>
    %267 = vector.shape_cast %266 : vector<2xf32> to vector<2x1xf32>
    %cst_65 = arith.constant 3.200000e+01 : f32
    %268 = vector.broadcast %cst_65 : f32 to vector<2x1xf32>
    %269 = arith.divf %267, %268 : vector<2x1xf32>
    %270 = vector.broadcast %260 : vector<2x1xf32> to vector<2x32xf32>
    %271 = arith.subf %256, %270 : vector<2x32xf32>
    %cst_66 = arith.constant 9.99999974E-6 : f32
    %272 = vector.broadcast %cst_66 : f32 to vector<2x1xf32>
    %273 = arith.addf %269, %272 : vector<2x1xf32>
    %274 = math.rsqrt %273 : vector<2x1xf32>
    %275 = vector.broadcast %274 : vector<2x1xf32> to vector<2x32xf32>
    %276 = arith.mulf %271, %275 : vector<2x32xf32>
    %277 = vector.broadcast %248 : vector<1x32xf32> to vector<2x32xf32>
    %278 = arith.mulf %276, %277 : vector<2x32xf32>
    %279 = vector.broadcast %249 : vector<1x32xf32> to vector<2x32xf32>
    %280 = arith.addf %278, %279 : vector<2x32xf32>
    %cst_67 = arith.constant 5.000000e-01 : f32
    %281 = vector.broadcast %cst_67 : f32 to vector<2x32xf32>
    %282 = arith.mulf %281, %280 : vector<2x32xf32>
    %cst_68 = arith.constant 4.471500e-02 : f32
    %283 = vector.broadcast %cst_68 : f32 to vector<2x32xf32>
    %284 = arith.mulf %283, %280 : vector<2x32xf32>
    %285 = arith.mulf %284, %280 : vector<2x32xf32>
    %286 = arith.mulf %285, %280 : vector<2x32xf32>
    %287 = arith.addf %280, %286 : vector<2x32xf32>
    %cst_69 = arith.constant 0.797884583 : f32
    %288 = vector.broadcast %cst_69 : f32 to vector<2x32xf32>
    %289 = arith.mulf %288, %287 : vector<2x32xf32>
    %290 = math.tanh %289 : vector<2x32xf32>
    %cst_70 = arith.constant 1.000000e+00 : f32
    %291 = vector.broadcast %cst_70 : f32 to vector<2x32xf32>
    %292 = arith.addf %291, %290 : vector<2x32xf32>
    %293 = arith.mulf %282, %292 : vector<2x32xf32>
    %294 = arith.truncf %293 : vector<2x32xf32> to vector<2x32xbf16>
    %cst_71 = arith.constant dense<0.000000e+00> : vector<2x4xf32>
    %295 = tpu.matmul %294, %251, %cst_71 {dimension_numbers = #tpu.dot_dimension_numbers<[1], [0], [0], [1], [0, 0, 1, 1], [], []>} : vector<2x32xbf16>, vector<32x4xbf16>, vector<2x4xf32> -> vector<2x4xf32>
    %296 = vector.broadcast %252 : vector<1x4xf32> to vector<2x4xf32>
    %297 = arith.addf %295, %296 : vector<2x4xf32>
    %c0_72 = arith.constant 0 : index
    %c0_73 = arith.constant 0 : index
    %298 = vector.load %arg2[%c0_72, %c0_73] : memref<2x4xf32, #tpu.memory_space<vmem>>, vector<2x4xf32>
    tpu.vector_store %arg2[%c0_72, %c0_73], %297 {strides = array<i32>} : memref<2x4xf32, #tpu.memory_space<vmem>>, vector<2x4xf32>,
    return
  }
}

</mosaic_0001>

<llo_original>
// kernel: tpu_custom_call.1
$region0: #{tpu_custom_call.1}
  #allocation0 [shape = 'u32[]', space=smem, size = 0x4, offset = 0x4, fixed_abs, tag = 'smem constant byte address 0x4 - core index']
  #allocation1 [shape = 'u32[144,128]{1,0:T(1,128)}', space=vmem, size = 0x12000, scoped, tag = 'internal scratch']
  %s0 = inlined_call_operand.hbm [shape: f32[8,128], index: 0, kind: input, shape index: {}]
  %s1 = inlined_call_operand.hbm [shape: f32[8,128], index: 1, kind: output, shape index: {}]
  %s2 = sld [smem:[#allocation0]]
  $region18: #{tpu_custom_call.1} parent=0
    _
  %s4 = ssub.s32 1, %s2
  %s5 = scalar_select 0, %s4, %s2
  $region1: #{tpu_custom_call.1} parent=0
    #allocation2 [shape = 'u8[4096]{0}', space=vmem, size = 0x1000, scoped, tag = 'input window, operand 0, single buffered']
    #allocation3 [shape = 's32[1]{0}', space=sflag, size = 0x4, scoped, tag = 'scoped memory for tpu_custom_call.1']
    #allocation4 [shape = 's32[1]{0}', space=sflag, size = 0x4, scoped, tag = 'scoped memory for tpu_custom_call.1']
    #allocation5 [shape = 'u8[4096]{0}', space=vmem, size = 0x1000, scoped, tag = 'output window, operand 0, single buffered']
    %6 = vsyncpa [#allocation3], 0
    %7 = vsyncpa [#allocation4], 0
    // Predicated region
    $region2: #{tpu_custom_call.1} parent=1 // pred_check
      _
    $region3: #{tpu_custom_call.1} parent=1 // pred_check_branch
      %9 = sbr.rel (0) target = $region5
    $region4: #{tpu_custom_call.1} parent=1 // pred_region
      %s11 = ssub.s32 128, 128
      %12 = vsyncadd [#allocation3], %s11
      %s14 = sshll.u32 [#allocation2], 4
      %s15 = int_to_ptr.vmem [resolvable:$true] %s14
      %17 = dma.hbm_to_vmem [thread:$0]  %s0, 128, %s15, [#allocation3]
    $region5: #{tpu_custom_call.1} parent=1 // pred_fallthru
      _
    // Predicated region
    $region6: #{tpu_custom_call.1} parent=1 // pred_check
      _
    $region7: #{tpu_custom_call.1} parent=1 // pred_check_branch
      %19 = sbr.rel (0) target = $region9
    $region8: #{tpu_custom_call.1} parent=1 // pred_region
      %20 = dma.done [#allocation3], 128
    $region9: #{tpu_custom_call.1} parent=1 // pred_fallthru
      _
    %v21 = vld [vmem:[#allocation2] sm:$0xff]
    %v22 = verf.f32.pop %v21
    %23 = vst [vmem:[#allocation5] sm:$0xff] %v22
    // Predicated region
    $region10: #{tpu_custom_call.1} parent=1 // pred_check
      _
    $region11: #{tpu_custom_call.1} parent=1 // pred_check_branch
      %25 = sbr.rel (0) target = $region13
    $region12: #{tpu_custom_call.1} parent=1 // pred_region
      %s27 = ssub.s32 128, 128
      %28 = vsyncadd [#allocation4], %s27
      %s30 = sshll.u32 [#allocation5], 4
      %s31 = int_to_ptr.vmem [resolvable:$true] %s30
      %33 = dma.vmem_to_hbm [thread:$0]  %s31, 128, %s1, [#allocation4]
    $region13: #{tpu_custom_call.1} parent=1 // pred_fallthru
      _
    // Predicated region
    $region14: #{tpu_custom_call.1} parent=1 // pred_check
      _
    $region15: #{tpu_custom_call.1} parent=1 // pred_check_branch
      %35 = sbr.rel (0) target = $region17
    $region16: #{tpu_custom_call.1} parent=1 // pred_region
      %36 = dma.done [#allocation4], 128
    $region17: #{tpu_custom_call.1} parent=1 // pred_fallthru
      _
    %37 = vsyncpa [#allocation3], 1
    %38 = vsyncpa [#allocation4], 1

// kernel: cnn_lstm_forward.1
$region0: #{cnn_lstm_forward.1}
  #allocation0 [shape = 'u32[]', space=smem, size = 0x4, offset = 0x4, fixed_abs, tag = 'smem constant byte address 0x4 - core index']
  #allocation1 [shape = 'u32[144,128]{1,0:T(1,128)}', space=vmem, size = 0x12000, scoped, tag = 'internal scratch']
  %s0 = inlined_call_operand.vmem [shape: f32[2,8,4], index: 0, kind: input, shape index: {}]
  %s1 = inlined_call_operand.hbm [shape: f32[144,128], index: 1, kind: input, shape index: {}]
  %s2 = inlined_call_operand.hbm [shape: f32[2,4], index: 2, kind: output, shape index: {}]
  %s3 = sld [smem:[#allocation0]]
  $region22: #{cnn_lstm_forward.1} parent=0
    _
  %s5 = ssub.s32 1, %s3
  %s6 = scalar_select 0, %s5, %s3
  $region1: #{cnn_lstm_forward.1} parent=0
    #allocation2 [shape = 'u8[73728]{0}', space=vmem, size = 0x12000, scoped, tag = 'input window, operand 1, single buffered']
    #allocation3 [shape = 's32[1]{0}', space=sflag, size = 0x4, scoped, tag = 'scoped memory for cnn_lstm_forward.1']
    #allocation4 [shape = 's32[1]{0}', space=sflag, size = 0x4, scoped, tag = 'scoped memory for cnn_lstm_forward.1']
    #allocation5 [shape = 'u8[1024]{0}', space=vmem, size = 0x400, scoped, tag = 'output window, operand 0, single buffered']
    %7 = vsyncpa [#allocation3], 0
    %8 = vsyncpa [#allocation4], 0
    // Predicated region
    $region2: #{cnn_lstm_forward.1} parent=1 // pred_check
      _
    $region3: #{cnn_lstm_forward.1} parent=1 // pred_check_branch
      %10 = sbr.rel (0) target = $region5
    $region4: #{cnn_lstm_forward.1} parent=1 // pred_region
      _
    $region5: #{cnn_lstm_forward.1} parent=1 // pred_fallthru
      _
    // Predicated region
    $region6: #{cnn_lstm_forward.1} parent=1 // pred_check
      _
    $region7: #{cnn_lstm_forward.1} parent=1 // pred_check_branch
      %12 = sbr.rel (0) target = $region9
    $region8: #{cnn_lstm_forward.1} parent=1 // pred_region
      %s14 = ssub.s32 2304, 2304
      %15 = vsyncadd [#allocation3], %s14
      %s16 = sshll.u32 [#allocation2], 4
      %s17 = int_to_ptr.vmem [resolvable:$true] %s16
      %22 = dma.hbm_to_vmem [thread:$0]  %s1, 2304, %s17, [#allocation3], 128, 128, 8
    $region9: #{cnn_lstm_forward.1} parent=1 // pred_fallthru
      _
    // Predicated region
    $region10: #{cnn_lstm_forward.1} parent=1 // pred_check
      _
    $region11: #{cnn_lstm_forward.1} parent=1 // pred_check_branch
      %24 = sbr.rel (0) target = $region13
    $region12: #{cnn_lstm_forward.1} parent=1 // pred_region
      %25 = dma.done [#allocation3], 2304
    $region13: #{cnn_lstm_forward.1} parent=1 // pred_fallthru
      _
    %v27 = vld [vmem:[%s0] sm:$0xff]
    %v28 = vld [vmem:[%s0 + $0x8] sm:$0xff]
    %v29 = vpack.c.bf16 %v28, %v27
    %v30 = vlaneseq
    %v31 = vshrl.u32 %v30, 7
    %v32 = vadd.s32 %v31, 8
    %v33 = vlaneseq
    %v34 = vand.u32 %v33, 127
    %v35 = vsub.s32 %v31, 1
    %v36 = vsub.s32 %v32, 1
    %vm37 = vcmp.eq.s32.totalorder %v34, %v35
    %vm38 = vcmp.eq.s32.totalorder %v34, %v36
    %vm39 = vcmp.gt.s32.totalorder %v31, 0
    %v40 = vsel %vm39, 1, 0
    %vm41 = vcmp.eq.s32.totalorder %v40, 1
    %vm42 = vmand %vm37, %vm41
    %vm43 = vmand %vm38, %vm41
    %v44 = vsel %vm42, 1.0, 0.0
    %v45 = vsel %vm43, 1.0, 0.0
    %v46 = vpack.c.bf16 %v45, %v44
    %v47 = vadd.s32 %v31, 1
    %v48 = vadd.s32 %v32, 1
    %vm49 = vcmp.eq.s32.totalorder %v34, %v47
    %vm50 = vcmp.eq.s32.totalorder %v34, %v48
    %vm51 = vcmp.lt.s32.totalorder %v31, 7
    %v52 = vsel %vm51, 1, 0
    %vm53 = vcmp.eq.s32.totalorder %v52, 1
    %vm54 = vmand %vm49, %vm53
    %vm55 = vmand %vm50, %vm53
    %v56 = vsel %vm54, 1.0, 0.0
    %v57 = vsel %vm55, 1.0, 0.0
    %v58 = vpack.c.bf16 %v57, %v56
    %vm59 = vcmask 130048
    %v61 = vsel %vm59, %v46, 0
    %63 = vmatprep.subr.bf16.mxu0 0
    %64 = vmatpush1.bf16.msra.mxu0 %v29
    %65 = vmatprep.subr.bf16.mxu0 0
    %66 = vmatpush1.bf16.msra.mxu0 0
    %67 = vmatprep.subr.bf16.mxu0 0
    %68 = vmatpush1.bf16.msra.mxu0 0
    %69 = vmatprep.subr.bf16.mxu0 0
    %70 = vmatpush1.bf16.msra.mxu0 0
    %71 = vmatprep.subr.bf16.mxu0 0
    %72 = vmatpush1.bf16.msra.mxu0 0
    %73 = vmatprep.subr.bf16.mxu0 0
    %74 = vmatpush1.bf16.msra.mxu0 0
    %75 = vmatprep.subr.bf16.mxu0 0
    %76 = vmatpush1.bf16.msra.mxu0 0
    %77 = vmatprep.subr.bf16.mxu0 0
    %78 = vmatpush1.bf16.msra.mxu0 0
    %79 = vmatprep.subr.bf16.mxu0 0
    %80 = vmatpush1.bf16.msra.mxu0 0
    %81 = vmatprep.subr.bf16.mxu0 0
    %82 = vmatpush1.bf16.msra.mxu0 0
    %83 = vmatprep.subr.bf16.mxu0 0
    %84 = vmatpush1.bf16.msra.mxu0 0
    %85 = vmatprep.subr.bf16.mxu0 0
    %86 = vmatpush1.bf16.msra.mxu0 0
    %87 = vmatprep.subr.bf16.mxu0 0
    %88 = vmatpush1.bf16.msra.mxu0 0
    %89 = vmatprep.subr.bf16.mxu0 0
    %90 = vmatpush1.bf16.msra.mxu0 0
    %91 = vmatprep.subr.bf16.mxu0 0
    %92 = vmatpush1.bf16.msra.mxu0 0
    %93 = vmatprep.subr.bf16.mxu0 0
    %94 = vmatpush1.bf16.msra.mxu0 0
    %95 = vmatprep.mubr.bf16.mxu0 0
    %96 = vmatmul.mubr.bf16.gmra.mrb[0].mxu0 %v61
    %v97 = vpop.f32.mrb[0].mxu0
    %v98 = vadd.f32 0.0, %v97
    %v99 = vpop.f32.mrb[0].mxu0
    %v100 = vpop.f32.mrb[0].mxu0
    %v101 = vadd.f32 0.0, %v100
    %v102 = vpop.f32.mrb[0].mxu0
    %103 = vdwg.mxu0
    %v104 = vpack.c.bf16 %v101, %v98
    %v106 = vsel %vm59, %v58, 0
    %108 = vmatprep.subr.bf16.mxu0 0
    %109 = vmatpush1.bf16.msra.mxu0 %v29
    %110 = vmatprep.subr.bf16.mxu0 0
    %111 = vmatpush1.bf16.msra.mxu0 0
    %112 = vmatprep.subr.bf16.mxu0 0
    %113 = vmatpush1.bf16.msra.mxu0 0
    %114 = vmatprep.subr.bf16.mxu0 0
    %115 = vmatpush1.bf16.msra.mxu0 0
    %116 = vmatprep.subr.bf16.mxu0 0
    %117 = vmatpush1.bf16.msra.mxu0 0
    %118 = vmatprep.subr.bf16.mxu0 0
    %119 = vmatpush1.bf16.msra.mxu0 0
    %120 = vmatprep.subr.bf16.mxu0 0
    %121 = vmatpush1.bf16.msra.mxu0 0
    %122 = vmatprep.subr.bf16.mxu0 0
    %123 = vmatpush1.bf16.msra.mxu0 0
    %124 = vmatprep.subr.bf16.mxu0 0
    %125 = vmatpush1.bf16.msra.mxu0 0
    %126 = vmatprep.subr.bf16.mxu0 0
    %127 = vmatpush1.bf16.msra.mxu0 0
    %128 = vmatprep.subr.bf16.mxu0 0
    %129 = vmatpush1.bf16.msra.mxu0 0
    %130 = vmatprep.subr.bf16.mxu0 0
    %131 = vmatpush1.bf16.msra.mxu0 0
    %132 = vmatprep.subr.bf16.mxu0 0
    %133 = vmatpush1.bf16.msra.mxu0 0
    %134 = vmatprep.subr.bf16.mxu0 0
    %135 = vmatpush1.bf16.msra.mxu0 0
    %136 = vmatprep.subr.bf16.mxu0 0
    %137 = vmatpush1.bf16.msra.mxu0 0
    %138 = vmatprep.subr.bf16.mxu0 0
    %139 = vmatpush1.bf16.msra.mxu0 0
    %140 = vmatprep.mubr.bf16.mxu0 0
    %141 = vmatmul.mubr.bf16.gmra.mrb[0].mxu0 %v106
    %v142 = vpop.f32.mrb[0].mxu0
    %v143 = vadd.f32 0.0, %v142
    %v144 = vpop.f32.mrb[0].mxu0
    %v145 = vpop.f32.mrb[0].mxu0
    %v146 = vadd.f32 0.0, %v145
    %v147 = vpop.f32.mrb[0].mxu0
    %148 = vdwg.mxu0
    %v149 = vpack.c.bf16 %v146, %v143
    %v150 = vld [vmem:[#allocation2] sm:$0xf]
    %v151 = vpack.c.bf16 %v150, %v150
    %v152 = vld [vmem:[#allocation2 + $0x4] sm:$0xf]
    %v153 = vpack.c.bf16 %v152, %v152
    %v154 = vld [vmem:[#allocation2 + $0x8] sm:$0xf]
    %v155 = vpack.c.bf16 %v154, %v154
    %v156 = vld [vmem:[#allocation2 + $0xc] sm:$0x1]
    %vm157 = vcmask 31744
    %v159 = vsel %vm157, %v29, 0
    %vm161 = vcmask 1041408
    %v163 = vsel %vm161, %v153, 0
    %165 = vmatprep.subr.bf16.mxu0 0
    %166 = vmatpush1.bf16.msra.mxu0 %v163
    %167 = vmatprep.subr.bf16.mxu0 0
    %168 = vmatpush1.bf16.msra.mxu0 0
    %169 = vmatprep.subr.bf16.mxu0 0
    %170 = vmatpush1.bf16.msra.mxu0 0
    %171 = vmatprep.subr.bf16.mxu0 0
    %172 = vmatpush1.bf16.msra.mxu0 0
    %173 = vmatprep.subr.bf16.mxu0 0
    %174 = vmatpush1.bf16.msra.mxu0 0
    %175 = vmatprep.subr.bf16.mxu0 0
    %176 = vmatpush1.bf16.msra.mxu0 0
    %177 = vmatprep.subr.bf16.mxu0 0
    %178 = vmatpush1.bf16.msra.mxu0 0
    %179 = vmatprep.subr.bf16.mxu0 0
    %180 = vmatpush1.bf16.msra.mxu0 0
    %181 = vmatprep.subr.bf16.mxu0 0
    %182 = vmatpush1.bf16.msra.mxu0 0
    %183 = vmatprep.subr.bf16.mxu0 0
    %184 = vmatpush1.bf16.msra.mxu0 0
    %185 = vmatprep.subr.bf16.mxu0 0
    %186 = vmatpush1.bf16.msra.mxu0 0
    %187 = vmatprep.subr.bf16.mxu0 0
    %188 = vmatpush1.bf16.msra.mxu0 0
    %189 = vmatprep.subr.bf16.mxu0 0
    %190 = vmatpush1.bf16.msra.mxu0 0
    %191 = vmatprep.subr.bf16.mxu0 0
    %192 = vmatpush1.bf16.msra.mxu0 0
    %193 = vmatprep.subr.bf16.mxu0 0
    %194 = vmatpush1.bf16.msra.mxu0 0
    %195 = vmatprep.subr.bf16.mxu0 0
    %196 = vmatpush1.bf16.msra.mxu0 0
    %197 = vmatprep.mubr.bf16.mxu0 0
    %198 = vmatmul.mubr.bf16.gmra.mrb[0].mxu0 %v159
    %v199 = vpop.f32.mrb[0].mxu0
    %v200 = vadd.f32 0.0, %v199
    %v201 = vpop.f32.mrb[0].mxu0
    %v202 = vpop.f32.mrb[0].mxu0
    %v203 = vadd.f32 0.0, %v202
    %v204 = vpop.f32.mrb[0].mxu0
    %205 = vdwg.mxu0
    %v207 = vsel %vm157, %v104, 0
    %v210 = vsel %vm161, %v151, 0
    %212 = vmatprep.subr.bf16.mxu0 0
    %213 = vmatpush1.bf16.msra.mxu0 %v210
    %214 = vmatprep.subr.bf16.mxu0 0
    %215 = vmatpush1.bf16.msra.mxu0 0
    %216 = vmatprep.subr.bf16.mxu0 0
    %217 = vmatpush1.bf16.msra.mxu0 0
    %218 = vmatprep.subr.bf16.mxu0 0
    %219 = vmatpush1.bf16.msra.mxu0 0
    %220 = vmatprep.subr.bf16.mxu0 0
    %221 = vmatpush1.bf16.msra.mxu0 0
    %222 = vmatprep.subr.bf16.mxu0 0
    %223 = vmatpush1.bf16.msra.mxu0 0
    %224 = vmatprep.subr.bf16.mxu0 0
    %225 = vmatpush1.bf16.msra.mxu0 0
    %226 = vmatprep.subr.bf16.mxu0 0
    %227 = vmatpush1.bf16.msra.mxu0 0
    %228 = vmatprep.subr.bf16.mxu0 0
    %229 = vmatpush1.bf16.msra.mxu0 0
    %230 = vmatprep.subr.bf16.mxu0 0
    %231 = vmatpush1.bf16.msra.mxu0 0
    %232 = vmatprep.subr.bf16.mxu0 0
    %233 = vmatpush1.bf16.msra.mxu0 0
    %234 = vmatprep.subr.bf16.mxu0 0
    %235 = vmatpush1.bf16.msra.mxu0 0
    %236 = vmatprep.subr.bf16.mxu0 0
    %237 = vmatpush1.bf16.msra.mxu0 0
    %238 = vmatprep.subr.bf16.mxu0 0
    %239 = vmatpush1.bf16.msra.mxu0 0
    %240 = vmatprep.subr.bf16.mxu0 0
    %241 = vmatpush1.bf16.msra.mxu0 0
    %242 = vmatprep.subr.bf16.mxu0 0
    %243 = vmatpush1.bf16.msra.mxu0 0
    %244 = vmatprep.mubr.bf16.mxu0 0
    %245 = vmatmul.mubr.bf16.gmra.mrb[0].mxu0 %v207
    %v246 = vpop.f32.mrb[0].mxu0
    %v247 = vadd.f32 %v200, %v246
    %v248 = vpop.f32.mrb[0].mxu0
    %v249 = vpop.f32.mrb[0].mxu0
    %v250 = vadd.f32 %v203, %v249
    %v251 = vpop.f32.mrb[0].mxu0
    %252 = vdwg.mxu0
    %v254 = vsel %vm157, %v149, 0
    %v257 = vsel %vm161, %v155, 0
    %259 = vmatprep.subr.bf16.mxu0 0
    %260 = vmatpush1.bf16.msra.mxu0 %v257
    %261 = vmatprep.subr.bf16.mxu0 0
    %262 = vmatpush1.bf16.msra.mxu0 0
    %263 = vmatprep.subr.bf16.mxu0 0
    %264 = vmatpush1.bf16.msra.mxu0 0
    %265 = vmatprep.subr.bf16.mxu0 0
    %266 = vmatpush1.bf16.msra.mxu0 0
    %267 = vmatprep.subr.bf16.mxu0 0
    %268 = vmatpush1.bf16.msra.mxu0 0
    %269 = vmatprep.subr.bf16.mxu0 0
    %270 = vmatpush1.bf16.msra.mxu0 0
    %271 = vmatprep.subr.bf16.mxu0 0
    %272 = vmatpush1.bf16.msra.mxu0 0
    %273 = vmatprep.subr.bf16.mxu0 0
    %274 = vmatpush1.bf16.msra.mxu0 0
    %275 = vmatprep.subr.bf16.mxu0 0
    %276 = vmatpush1.bf16.msra.mxu0 0
    %277 = vmatprep.subr.bf16.mxu0 0
    %278 = vmatpush1.bf16.msra.mxu0 0
    %279 = vmatprep.subr.bf16.mxu0 0
    %280 = vmatpush1.bf16.msra.mxu0 0
    %281 = vmatprep.subr.bf16.mxu0 0
    %282 = vmatpush1.bf16.msra.mxu0 0
    %283 = vmatprep.subr.bf16.mxu0 0
    %284 = vmatpush1.bf16.msra.mxu0 0
    %285 = vmatprep.subr.bf16.mxu0 0
    %286 = vmatpush1.bf16.msra.mxu0 0
    %287 = vmatprep.subr.bf16.mxu0 0
    %288 = vmatpush1.bf16.msra.mxu0 0
    %289 = vmatprep.subr.bf16.mxu0 0
    %290 = vmatpush1.bf16.msra.mxu0 0
    %291 = vmatprep.mubr.bf16.mxu0 0
    %292 = vmatmul.mubr.bf16.gmra.mrb[0].mxu0 %v254
    %v293 = vpop.f32.mrb[0].mxu0
    %v294 = vadd.f32 0.0, %v293
    %v295 = vpop.f32.mrb[0].mxu0
    %v296 = vpop.f32.mrb[0].mxu0
    %v297 = vadd.f32 0.0, %v296
    %v298 = vpop.f32.mrb[0].mxu0
    %299 = vdwg.mxu0
    %v300 = vadd.f32 %v247, %v294
    %v301 = vadd.f32 %v250, %v297
    %v302 = vlaneseq
    %v303 = vshrl.u32 %v302, 7
    %v304 = vsub.s32 0, %v303
    %v305 = vrot.slane %v156, %v304
    %v306 = vadd.f32 %v300, %v305
    %v307 = vadd.f32 %v301, %v305
    %v308 = vmax.f32 %v306, 0.0
    %v309 = vmax.f32 %v307, 0.0
    %v310 = vld [vmem:[#allocation2 + $0x10] sm:$0xff]
    %v311 = vld [vmem:[#allocation2 + $0x18] sm:$0xff]
    %v312 = vpack.c.bf16 %v311, %v310
    %v313 = vld [vmem:[#allocation2 + $0x40] sm:$0x1]
    %v314 = vpack.c.bf16 %v309, %v308
    %v315 = vlaneseq
    %v316 = vshrl.u32 %v315, 7
    %v317 = vsub.s32 0, %v316
    %v318 = vrot.slane %v313, %v317
    %v320 = vsel %vm59, %v314, 0
    %322 = vmatprep.subr.bf16.mxu0 0
    %323 = vmatpush1.bf16.msra.mxu0 %v312
    %324 = vmatprep.subr.bf16.mxu0 0
    %325 = vmatpush1.bf16.msra.mxu0 0
    %326 = vmatprep.subr.bf16.mxu0 0
    %327 = vmatpush1.bf16.msra.mxu0 0
    %328 = vmatprep.subr.bf16.mxu0 0
    %329 = vmatpush1.bf16.msra.mxu0 0
    %330 = vmatprep.subr.bf16.mxu0 0
    %331 = vmatpush1.bf16.msra.mxu0 0
    %332 = vmatprep.subr.bf16.mxu0 0
    %333 = vmatpush1.bf16.msra.mxu0 0
    %334 = vmatprep.subr.bf16.mxu0 0
    %335 = vmatpush1.bf16.msra.mxu0 0
    %336 = vmatprep.subr.bf16.mxu0 0
    %337 = vmatpush1.bf16.msra.mxu0 0
    %338 = vmatprep.subr.bf16.mxu0 0
    %339 = vmatpush1.bf16.msra.mxu0 0
    %340 = vmatprep.subr.bf16.mxu0 0
    %341 = vmatpush1.bf16.msra.mxu0 0
    %342 = vmatprep.subr.bf16.mxu0 0
    %343 = vmatpush1.bf16.msra.mxu0 0
    %344 = vmatprep.subr.bf16.mxu0 0
    %345 = vmatpush1.bf16.msra.mxu0 0
    %346 = vmatprep.subr.bf16.mxu0 0
    %347 = vmatpush1.bf16.msra.mxu0 0
    %348 = vmatprep.subr.bf16.mxu0 0
    %349 = vmatpush1.bf16.msra.mxu0 0
    %350 = vmatprep.subr.bf16.mxu0 0
    %351 = vmatpush1.bf16.msra.mxu0 0
    %352 = vmatprep.subr.bf16.mxu0 0
    %353 = vmatpush1.bf16.msra.mxu0 0
    %354 = vmatprep.mubr.bf16.mxu0 0
    %355 = vmatmul.mubr.bf16.gmra.mrb[0].mxu0 %v320
    %v356 = vpop.f32.mrb[0].mxu0
    %v357 = vadd.f32 %v318, %v356
    %v358 = vpop.f32.mrb[0].mxu0
    %v359 = vpop.f32.mrb[0].mxu0
    %v360 = vadd.f32 %v318, %v359
    %v361 = vpop.f32.mrb[0].mxu0
    %362 = vdwg.mxu0
    %v363 = vld [vmem:[#allocation2 + $0x20] sm:$0xff]
    %v364 = vld [vmem:[#allocation2 + $0x28] sm:$0xff]
    %v365 = vld [vmem:[#allocation2 + $0x30] sm:$0xff]
    %v366 = vld [vmem:[#allocation2 + $0x38] sm:$0xff]
    %v367 = vpack.c.bf16 %v364, %v363
    %v368 = vpack.c.bf16 %v366, %v365
    %vm369 = vcmask 261120
    %v371 = vsel %vm369, 0, 0
    %373 = vmatprep.subr.bf16.mxu0 0
    %374 = vmatpush1.bf16.msra.mxu0 %v367
    %375 = vmatprep.subr.bf16.mxu0 0
    %376 = vmatpush1.bf16.msra.mxu0 %v368
    %377 = vmatprep.subr.bf16.mxu0 0
    %378 = vmatpush1.bf16.msra.mxu0 0
    %379 = vmatprep.subr.bf16.mxu0 0
    %380 = vmatpush1.bf16.msra.mxu0 0
    %381 = vmatprep.subr.bf16.mxu0 0
    %382 = vmatpush1.bf16.msra.mxu0 0
    %383 = vmatprep.subr.bf16.mxu0 0
    %384 = vmatpush1.bf16.msra.mxu0 0
    %385 = vmatprep.subr.bf16.mxu0 0
    %386 = vmatpush1.bf16.msra.mxu0 0
    %387 = vmatprep.subr.bf16.mxu0 0
    %388 = vmatpush1.bf16.msra.mxu0 0
    %389 = vmatprep.subr.bf16.mxu0 0
    %390 = vmatpush1.bf16.msra.mxu0 0
    %391 = vmatprep.subr.bf16.mxu0 0
    %392 = vmatpush1.bf16.msra.mxu0 0
    %393 = vmatprep.subr.bf16.mxu0 0
    %394 = vmatpush1.bf16.msra.mxu0 0
    %395 = vmatprep.subr.bf16.mxu0 0
    %396 = vmatpush1.bf16.msra.mxu0 0
    %397 = vmatprep.subr.bf16.mxu0 0
    %398 = vmatpush1.bf16.msra.mxu0 0
    %399 = vmatprep.subr.bf16.mxu0 0
    %400 = vmatpush1.bf16.msra.mxu0 0
    %401 = vmatprep.subr.bf16.mxu0 0
    %402 = vmatpush1.bf16.msra.mxu0 0
    %403 = vmatprep.subr.bf16.mxu0 0
    %404 = vmatpush1.bf16.msra.mxu0 0
    %405 = vmatprep.mubr.bf16.mxu0 0
    %406 = vmatmul.mubr.bf16.gmra.mrb[0].mxu0 %v371
    %v407 = vpop.f32.mrb[0].mxu0
    %v408 = vadd.f32 0.0, %v407
    %v409 = vpop.f32.mrb[0].mxu0
    %v410 = vpop.f32.mrb[0].mxu0
    %v411 = vpop.f32.mrb[0].mxu0
    %412 = vdwg.mxu0
    %v414 = vrot.slane %v408, 1
    %v417 = vadd.f32 %v357, %v408
    %v418 = vadd.f32 %v360, %v414
    %v419 = vxor.u32 %v417, 2147483648
    %v420 = vxor.u32 %v418, 2147483648
    %v421 = vmul.f32 %v419, 1.442695
    %v422 = vpow.pop %v421
    %v423 = vmul.f32 %v420, 1.442695
    %v424 = vpow.pop %v423
    %v425 = vadd.f32 %v422, 1.0
    %v426 = vadd.f32 %v424, 1.0
    %v427 = vrcp.pop %v425
    %v428 = vmul.f32 1.0, %v427
    %v429 = vrcp.pop %v426
    %v430 = vmul.f32 1.0, %v429
    %v431 = vmul.f32 %v428, 2.0
    %v432 = vmul.f32 %v430, 2.0
    %v433 = vsub.f32 %v431, 1.0
    %v434 = vsub.f32 %v432, 1.0
    %v435 = vmul.f32 %v428, 0.0
    %v436 = vmul.f32 %v430, 0.0
    %439 = vrot.lane.b32.xlu0 %v433, 64
    %v440 = vpop.permute.xlu0 %439
    %441 = vrot.lane.b32.xlu0 %v434, 64
    %v442 = vpop.permute.xlu0 %441
    %v445 = vmul.f32 %v428, %v440
    %v446 = vmul.f32 %v430, %v442
    %449 = vrot.lane.b32.xlu0 %v445, 32
    %v450 = vpop.permute.xlu0 %449
    %451 = vrot.lane.b32.xlu0 %v446, 32
    %v452 = vpop.permute.xlu0 %451
    %v455 = vadd.f32 %v435, %v450
    %v456 = vadd.f32 %v436, %v452
    %v457 = vtanh.pop %v455
    %v458 = vtanh.pop %v456
    %461 = vrot.lane.b32.xlu0 %v457, 64
    %v462 = vpop.permute.xlu0 %461
    %463 = vrot.lane.b32.xlu0 %v458, 64
    %v464 = vpop.permute.xlu0 %463
    %v467 = vmul.f32 %v428, %v462
    %v468 = vmul.f32 %v430, %v464
    %v469 = vpack.c.bf16 %v467, %v467
    %v470 = vpack.c.bf16 %v468, %v468
    %v473 = vunpack.c.l.b16 %v469
    %v474 = vunpack.c.l.b16 %v470
    %v475 = vrot.slane %v474, 7
    %vm476 = vcmask 1041409
    %v477 = vsel %vm476, %v475, %v473
    %v478 = vpack.c.b16 %v477, %v477
    %479 = vrot.lane.b32.xlu0 %v478, 32
    %v480 = vpop.permute.xlu0 %479
    %v482 = vsel %vm369, %v480, 0
    %484 = vmatprep.subr.bf16.mxu0 0
    %485 = vmatpush1.bf16.msra.mxu0 %v367
    %486 = vmatprep.subr.bf16.mxu0 0
    %487 = vmatpush1.bf16.msra.mxu0 %v368
    %488 = vmatprep.subr.bf16.mxu0 0
    %489 = vmatpush1.bf16.msra.mxu0 0
    %490 = vmatprep.subr.bf16.mxu0 0
    %491 = vmatpush1.bf16.msra.mxu0 0
    %492 = vmatprep.subr.bf16.mxu0 0
    %493 = vmatpush1.bf16.msra.mxu0 0
    %494 = vmatprep.subr.bf16.mxu0 0
    %495 = vmatpush1.bf16.msra.mxu0 0
    %496 = vmatprep.subr.bf16.mxu0 0
    %497 = vmatpush1.bf16.msra.mxu0 0
    %498 = vmatprep.subr.bf16.mxu0 0
    %499 = vmatpush1.bf16.msra.mxu0 0
    %500 = vmatprep.subr.bf16.mxu0 0
    %501 = vmatpush1.bf16.msra.mxu0 0
    %502 = vmatprep.subr.bf16.mxu0 0
    %503 = vmatpush1.bf16.msra.mxu0 0
    %504 = vmatprep.subr.bf16.mxu0 0
    %505 = vmatpush1.bf16.msra.mxu0 0
    %506 = vmatprep.subr.bf16.mxu0 0
    %507 = vmatpush1.bf16.msra.mxu0 0
    %508 = vmatprep.subr.bf16.mxu0 0
    %509 = vmatpush1.bf16.msra.mxu0 0
    %510 = vmatprep.subr.bf16.mxu0 0
    %511 = vmatpush1.bf16.msra.mxu0 0
    %512 = vmatprep.subr.bf16.mxu0 0
    %513 = vmatpush1.bf16.msra.mxu0 0
    %514 = vmatprep.subr.bf16.mxu0 0
    %515 = vmatpush1.bf16.msra.mxu0 0
    %516 = vmatprep.mubr.bf16.mxu0 0
    %517 = vmatmul.mubr.bf16.gmra.mrb[0].mxu0 %v482
    %v518 = vpop.f32.mrb[0].mxu0
    %v519 = vadd.f32 0.0, %v518
    %v520 = vpop.f32.mrb[0].mxu0
    %v521 = vpop.f32.mrb[0].mxu0
    %v522 = vpop.f32.mrb[0].mxu0
    %523 = vdwg.mxu0
    %v525 = vrot.slane %v519, 7
    %v528 = vadd.f32 %v357, %v525
    %v529 = vadd.f32 %v360, %v519
    %v530 = vxor.u32 %v528, 2147483648
    %v531 = vxor.u32 %v529, 2147483648
    %v532 = vmul.f32 %v530, 1.442695
    %v533 = vpow.pop %v532
    %v534 = vmul.f32 %v531, 1.442695
    %v535 = vpow.pop %v534
    %v536 = vadd.f32 %v533, 1.0
    %v537 = vadd.f32 %v535, 1.0
    %v538 = vrcp.pop %v536
    %v539 = vmul.f32 1.0, %v538
    %v540 = vrcp.pop %v537
    %v541 = vmul.f32 1.0, %v540
    %v542 = vmul.f32 %v539, 2.0
    %v543 = vmul.f32 %v541, 2.0
    %v544 = vsub.f32 %v542, 1.0
    %v545 = vsub.f32 %v543, 1.0
    %v548 = vrot.slane %v455, 7
    %v549 = vrot.slane %v456, 7
    %v552 = vmul.f32 %v539, %v548
    %v553 = vmul.f32 %v541, %v549
    %556 = vrot.lane.b32.xlu0 %v544, 64
    %v557 = vpop.permute.xlu0 %556
    %558 = vrot.lane.b32.xlu0 %v545, 64
    %v559 = vpop.permute.xlu0 %558
    %v562 = vmul.f32 %v539, %v557
    %v563 = vmul.f32 %v541, %v559
    %566 = vrot.lane.b32.xlu0 %v562, 32
    %v567 = vpop.permute.xlu0 %566
    %568 = vrot.lane.b32.xlu0 %v563, 32
    %v569 = vpop.permute.xlu0 %568
    %v572 = vadd.f32 %v552, %v567
    %v573 = vadd.f32 %v553, %v569
    %v574 = vtanh.pop %v572
    %v575 = vtanh.pop %v573
    %578 = vrot.lane.b32.xlu0 %v574, 64
    %v579 = vpop.permute.xlu0 %578
    %580 = vrot.lane.b32.xlu0 %v575, 64
    %v581 = vpop.permute.xlu0 %580
    %v584 = vmul.f32 %v539, %v579
    %v585 = vmul.f32 %v541, %v581
    %v586 = vpack.c.bf16 %v584, %v584
    %v587 = vpack.c.bf16 %v585, %v585
    %v590 = vunpack.c.l.b16 %v586
    %v591 = vunpack.c.l.b16 %v587
    %v592 = vrot.slane %v590, 1
    %v593 = vsel %vm476, %v591, %v592
    %v594 = vpack.c.b16 %v593, %v593
    %595 = vrot.lane.b32.xlu0 %v594, 32
    %v596 = vpop.permute.xlu0 %595
    %v598 = vsel %vm369, %v596, 0
    %600 = vmatprep.subr.bf16.mxu0 0
    %601 = vmatpush1.bf16.msra.mxu0 %v367
    %602 = vmatprep.subr.bf16.mxu0 0
    %603 = vmatpush1.bf16.msra.mxu0 %v368
    %604 = vmatprep.subr.bf16.mxu0 0
    %605 = vmatpush1.bf16.msra.mxu0 0
    %606 = vmatprep.subr.bf16.mxu0 0
    %607 = vmatpush1.bf16.msra.mxu0 0
    %608 = vmatprep.subr.bf16.mxu0 0
    %609 = vmatpush1.bf16.msra.mxu0 0
    %610 = vmatprep.subr.bf16.mxu0 0
    %611 = vmatpush1.bf16.msra.mxu0 0
    %612 = vmatprep.subr.bf16.mxu0 0
    %613 = vmatpush1.bf16.msra.mxu0 0
    %614 = vmatprep.subr.bf16.mxu0 0
    %615 = vmatpush1.bf16.msra.mxu0 0
    %616 = vmatprep.subr.bf16.mxu0 0
    %617 = vmatpush1.bf16.msra.mxu0 0
    %618 = vmatprep.subr.bf16.mxu0 0
    %619 = vmatpush1.bf16.msra.mxu0 0
    %620 = vmatprep.subr.bf16.mxu0 0
    %621 = vmatpush1.bf16.msra.mxu0 0
    %622 = vmatprep.subr.bf16.mxu0 0
    %623 = vmatpush1.bf16.msra.mxu0 0
    %624 = vmatprep.subr.bf16.mxu0 0
    %625 = vmatpush1.bf16.msra.mxu0 0
    %626 = vmatprep.subr.bf16.mxu0 0
    %627 = vmatpush1.bf16.msra.mxu0 0
    %628 = vmatprep.subr.bf16.mxu0 0
    %629 = vmatpush1.bf16.msra.mxu0 0
    %630 = vmatprep.subr.bf16.mxu0 0
    %631 = vmatpush1.bf16.msra.mxu0 0
    %632 = vmatprep.mubr.bf16.mxu0 0
    %633 = vmatmul.mubr.bf16.gmra.mrb[0].mxu0 %v598
    %v634 = vpop.f32.mrb[0].mxu0
    %v635 = vadd.f32 0.0, %v634
    %v636 = vpop.f32.mrb[0].mxu0
    %v637 = vpop.f32.mrb[0].mxu0
    %v638 = vpop.f32.mrb[0].mxu0
    %639 = vdwg.mxu0
    %v641 = vrot.slane %v635, 6
    %v642 = vrot.slane %v635, 7
    %v645 = vadd.f32 %v357, %v641
    %v646 = vadd.f32 %v360, %v642
    %v647 = vxor.u32 %v645, 2147483648
    %v648 = vxor.u32 %v646, 2147483648
    %v649 = vmul.f32 %v647, 1.442695
    %v650 = vpow.pop %v649
    %v651 = vmul.f32 %v648, 1.442695
    %v652 = vpow.pop %v651
    %v653 = vadd.f32 %v650, 1.0
    %v654 = vadd.f32 %v652, 1.0
    %v655 = vrcp.pop %v653
    %v656 = vmul.f32 1.0, %v655
    %v657 = vrcp.pop %v654
    %v658 = vmul.f32 1.0, %v657
    %v659 = vmul.f32 %v656, 2.0
    %v660 = vmul.f32 %v658, 2.0
    %v661 = vsub.f32 %v659, 1.0
    %v662 = vsub.f32 %v660, 1.0
    %v665 = vrot.slane %v572, 7
    %v666 = vrot.slane %v573, 7
    %v669 = vmul.f32 %v656, %v665
    %v670 = vmul.f32 %v658, %v666
    %673 = vrot.lane.b32.xlu0 %v661, 64
    %v674 = vpop.permute.xlu0 %673
    %675 = vrot.lane.b32.xlu0 %v662, 64
    %v676 = vpop.permute.xlu0 %675
    %v679 = vmul.f32 %v656, %v674
    %v680 = vmul.f32 %v658, %v676
    %683 = vrot.lane.b32.xlu0 %v679, 32
    %v684 = vpop.permute.xlu0 %683
    %685 = vrot.lane.b32.xlu0 %v680, 32
    %v686 = vpop.permute.xlu0 %685
    %v689 = vadd.f32 %v669, %v684
    %v690 = vadd.f32 %v670, %v686
    %v691 = vtanh.pop %v689
    %v692 = vtanh.pop %v690
    %695 = vrot.lane.b32.xlu0 %v691, 64
    %v696 = vpop.permute.xlu0 %695
    %697 = vrot.lane.b32.xlu0 %v692, 64
    %v698 = vpop.permute.xlu0 %697
    %v701 = vmul.f32 %v656, %v696
    %v702 = vmul.f32 %v658, %v698
    %v703 = vpack.c.bf16 %v701, %v701
    %v704 = vpack.c.bf16 %v702, %v702
    %v707 = vunpack.c.l.b16 %v703
    %v708 = vunpack.c.l.b16 %v704
    %v709 = vrot.slane %v707, 2
    %v710 = vrot.slane %v708, 1
    %v711 = vsel %vm476, %v710, %v709
    %v712 = vpack.c.b16 %v711, %v711
    %713 = vrot.lane.b32.xlu0 %v712, 32
    %v714 = vpop.permute.xlu0 %713
    %v716 = vsel %vm369, %v714, 0
    %718 = vmatprep.subr.bf16.mxu0 0
    %719 = vmatpush1.bf16.msra.mxu0 %v367
    %720 = vmatprep.subr.bf16.mxu0 0
    %721 = vmatpush1.bf16.msra.mxu0 %v368
    %722 = vmatprep.subr.bf16.mxu0 0
    %723 = vmatpush1.bf16.msra.mxu0 0
    %724 = vmatprep.subr.bf16.mxu0 0
    %725 = vmatpush1.bf16.msra.mxu0 0
    %726 = vmatprep.subr.bf16.mxu0 0
    %727 = vmatpush1.bf16.msra.mxu0 0
    %728 = vmatprep.subr.bf16.mxu0 0
    %729 = vmatpush1.bf16.msra.mxu0 0
    %730 = vmatprep.subr.bf16.mxu0 0
    %731 = vmatpush1.bf16.msra.mxu0 0
    %732 = vmatprep.subr.bf16.mxu0 0
    %733 = vmatpush1.bf16.msra.mxu0 0
    %734 = vmatprep.subr.bf16.mxu0 0
    %735 = vmatpush1.bf16.msra.mxu0 0
    %736 = vmatprep.subr.bf16.mxu0 0
    %737 = vmatpush1.bf16.msra.mxu0 0
    %738 = vmatprep.subr.bf16.mxu0 0
    %739 = vmatpush1.bf16.msra.mxu0 0
    %740 = vmatprep.subr.bf16.mxu0 0
    %741 = vmatpush1.bf16.msra.mxu0 0
    %742 = vmatprep.subr.bf16.mxu0 0
    %743 = vmatpush1.bf16.msra.mxu0 0
    %744 = vmatprep.subr.bf16.mxu0 0
    %745 = vmatpush1.bf16.msra.mxu0 0
    %746 = vmatprep.subr.bf16.mxu0 0
    %747 = vmatpush1.bf16.msra.mxu0 0
    %748 = vmatprep.subr.bf16.mxu0 0
    %749 = vmatpush1.bf16.msra.mxu0 0
    %750 = vmatprep.mubr.bf16.mxu0 0
    %751 = vmatmul.mubr.bf16.gmra.mrb[0].mxu0 %v716
    %v752 = vpop.f32.mrb[0].mxu0
    %v753 = vadd.f32 0.0, %v752
    %v754 = vpop.f32.mrb[0].mxu0
    %v755 = vpop.f32.mrb[0].mxu0
    %v756 = vpop.f32.mrb[0].mxu0
    %757 = vdwg.mxu0
    %v759 = vrot.slane %v753, 5
    %v760 = vrot.slane %v753, 6
    %v763 = vadd.f32 %v357, %v759
    %v764 = vadd.f32 %v360, %v760
    %v765 = vxor.u32 %v763, 2147483648
    %v766 = vxor.u32 %v764, 2147483648
    %v767 = vmul.f32 %v765, 1.442695
    %v768 = vpow.pop %v767
    %v769 = vmul.f32 %v766, 1.442695
    %v770 = vpow.pop %v769
    %v771 = vadd.f32 %v768, 1.0
    %v772 = vadd.f32 %v770, 1.0
    %v773 = vrcp.pop %v771
    %v774 = vmul.f32 1.0, %v773
    %v775 = vrcp.pop %v772
    %v776 = vmul.f32 1.0, %v775
    %v777 = vmul.f32 %v774, 2.0
    %v778 = vmul.f32 %v776, 2.0
    %v779 = vsub.f32 %v777, 1.0
    %v780 = vsub.f32 %v778, 1.0
    %v783 = vrot.slane %v689, 7
    %v784 = vrot.slane %v690, 7
    %v787 = vmul.f32 %v774, %v783
    %v788 = vmul.f32 %v776, %v784
    %791 = vrot.lane.b32.xlu0 %v779, 64
    %v792 = vpop.permute.xlu0 %791
    %793 = vrot.lane.b32.xlu0 %v780, 64
    %v794 = vpop.permute.xlu0 %793
    %v797 = vmul.f32 %v774, %v792
    %v798 = vmul.f32 %v776, %v794
    %801 = vrot.lane.b32.xlu0 %v797, 32
    %v802 = vpop.permute.xlu0 %801
    %803 = vrot.lane.b32.xlu0 %v798, 32
    %v804 = vpop.permute.xlu0 %803
    %v807 = vadd.f32 %v787, %v802
    %v808 = vadd.f32 %v788, %v804
    %v809 = vtanh.pop %v807
    %v810 = vtanh.pop %v808
    %813 = vrot.lane.b32.xlu0 %v809, 64
    %v814 = vpop.permute.xlu0 %813
    %815 = vrot.lane.b32.xlu0 %v810, 64
    %v816 = vpop.permute.xlu0 %815
    %v819 = vmul.f32 %v774, %v814
    %v820 = vmul.f32 %v776, %v816
    %v821 = vpack.c.bf16 %v819, %v819
    %v822 = vpack.c.bf16 %v820, %v820
    %v825 = vunpack.c.l.b16 %v821
    %v826 = vunpack.c.l.b16 %v822
    %v827 = vrot.slane %v825, 3
    %v828 = vrot.slane %v826, 2
    %v829 = vsel %vm476, %v828, %v827
    %v830 = vpack.c.b16 %v829, %v829
    %831 = vrot.lane.b32.xlu0 %v830, 32
    %v832 = vpop.permute.xlu0 %831
    %v834 = vsel %vm369, %v832, 0
    %836 = vmatprep.subr.bf16.mxu0 0
    %837 = vmatpush1.bf16.msra.mxu0 %v367
    %838 = vmatprep.subr.bf16.mxu0 0
    %839 = vmatpush1.bf16.msra.mxu0 %v368
    %840 = vmatprep.subr.bf16.mxu0 0
    %841 = vmatpush1.bf16.msra.mxu0 0
    %842 = vmatprep.subr.bf16.mxu0 0
    %843 = vmatpush1.bf16.msra.mxu0 0
    %844 = vmatprep.subr.bf16.mxu0 0
    %845 = vmatpush1.bf16.msra.mxu0 0
    %846 = vmatprep.subr.bf16.mxu0 0
    %847 = vmatpush1.bf16.msra.mxu0 0
    %848 = vmatprep.subr.bf16.mxu0 0
    %849 = vmatpush1.bf16.msra.mxu0 0
    %850 = vmatprep.subr.bf16.mxu0 0
    %851 = vmatpush1.bf16.msra.mxu0 0
    %852 = vmatprep.subr.bf16.mxu0 0
    %853 = vmatpush1.bf16.msra.mxu0 0
    %854 = vmatprep.subr.bf16.mxu0 0
    %855 = vmatpush1.bf16.msra.mxu0 0
    %856 = vmatprep.subr.bf16.mxu0 0
    %857 = vmatpush1.bf16.msra.mxu0 0
    %858 = vmatprep.subr.bf16.mxu0 0
    %859 = vmatpush1.bf16.msra.mxu0 0
    %860 = vmatprep.subr.bf16.mxu0 0
    %861 = vmatpush1.bf16.msra.mxu0 0
    %862 = vmatprep.subr.bf16.mxu0 0
    %863 = vmatpush1.bf16.msra.mxu0 0
    %864 = vmatprep.subr.bf16.mxu0 0
    %865 = vmatpush1.bf16.msra.mxu0 0
    %866 = vmatprep.subr.bf16.mxu0 0
    %867 = vmatpush1.bf16.msra.mxu0 0
    %868 = vmatprep.mubr.bf16.mxu0 0
    %869 = vmatmul.mubr.bf16.gmra.mrb[0].mxu0 %v834
    %v870 = vpop.f32.mrb[0].mxu0
    %v871 = vadd.f32 0.0, %v870
    %v872 = vpop.f32.mrb[0].mxu0
    %v873 = vpop.f32.mrb[0].mxu0
    %v874 = vpop.f32.mrb[0].mxu0
    %875 = vdwg.mxu0
    %v877 = vrot.slane %v871, 4
    %v878 = vrot.slane %v871, 5
    %v881 = vadd.f32 %v357, %v877
    %v882 = vadd.f32 %v360, %v878
    %v883 = vxor.u32 %v881, 2147483648
    %v884 = vxor.u32 %v882, 2147483648
    %v885 = vmul.f32 %v883, 1.442695
    %v886 = vpow.pop %v885
    %v887 = vmul.f32 %v884, 1.442695
    %v888 = vpow.pop %v887
    %v889 = vadd.f32 %v886, 1.0
    %v890 = vadd.f32 %v888, 1.0
    %v891 = vrcp.pop %v889
    %v892 = vmul.f32 1.0, %v891
    %v893 = vrcp.pop %v890
    %v894 = vmul.f32 1.0, %v893
    %v895 = vmul.f32 %v892, 2.0
    %v896 = vmul.f32 %v894, 2.0
    %v897 = vsub.f32 %v895, 1.0
    %v898 = vsub.f32 %v896, 1.0
    %v901 = vrot.slane %v807, 7
    %v902 = vrot.slane %v808, 7
    %v905 = vmul.f32 %v892, %v901
    %v906 = vmul.f32 %v894, %v902
    %909 = vrot.lane.b32.xlu0 %v897, 64
    %v910 = vpop.permute.xlu0 %909
    %911 = vrot.lane.b32.xlu0 %v898, 64
    %v912 = vpop.permute.xlu0 %911
    %v915 = vmul.f32 %v892, %v910
    %v916 = vmul.f32 %v894, %v912
    %919 = vrot.lane.b32.xlu0 %v915, 32
    %v920 = vpop.permute.xlu0 %919
    %921 = vrot.lane.b32.xlu0 %v916, 32
    %v922 = vpop.permute.xlu0 %921
    %v925 = vadd.f32 %v905, %v920
    %v926 = vadd.f32 %v906, %v922
    %v927 = vtanh.pop %v925
    %v928 = vtanh.pop %v926
    %931 = vrot.lane.b32.xlu0 %v927, 64
    %v932 = vpop.permute.xlu0 %931
    %933 = vrot.lane.b32.xlu0 %v928, 64
    %v934 = vpop.permute.xlu0 %933
    %v937 = vmul.f32 %v892, %v932
    %v938 = vmul.f32 %v894, %v934
    %v939 = vpack.c.bf16 %v937, %v937
    %v940 = vpack.c.bf16 %v938, %v938
    %v943 = vunpack.c.l.b16 %v939
    %v944 = vunpack.c.l.b16 %v940
    %v945 = vrot.slane %v943, 4
    %v946 = vrot.slane %v944, 3
    %v947 = vsel %vm476, %v946, %v945
    %v948 = vpack.c.b16 %v947, %v947
    %949 = vrot.lane.b32.xlu0 %v948, 32
    %v950 = vpop.permute.xlu0 %949
    %v952 = vsel %vm369, %v950, 0
    %954 = vmatprep.subr.bf16.mxu0 0
    %955 = vmatpush1.bf16.msra.mxu0 %v367
    %956 = vmatprep.subr.bf16.mxu0 0
    %957 = vmatpush1.bf16.msra.mxu0 %v368
    %958 = vmatprep.subr.bf16.mxu0 0
    %959 = vmatpush1.bf16.msra.mxu0 0
    %960 = vmatprep.subr.bf16.mxu0 0
    %961 = vmatpush1.bf16.msra.mxu0 0
    %962 = vmatprep.subr.bf16.mxu0 0
    %963 = vmatpush1.bf16.msra.mxu0 0
    %964 = vmatprep.subr.bf16.mxu0 0
    %965 = vmatpush1.bf16.msra.mxu0 0
    %966 = vmatprep.subr.bf16.mxu0 0
    %967 = vmatpush1.bf16.msra.mxu0 0
    %968 = vmatprep.subr.bf16.mxu0 0
    %969 = vmatpush1.bf16.msra.mxu0 0
    %970 = vmatprep.subr.bf16.mxu0 0
    %971 = vmatpush1.bf16.msra.mxu0 0
    %972 = vmatprep.subr.bf16.mxu0 0
    %973 = vmatpush1.bf16.msra.mxu0 0
    %974 = vmatprep.subr.bf16.mxu0 0
    %975 = vmatpush1.bf16.msra.mxu0 0
    %976 = vmatprep.subr.bf16.mxu0 0
    %977 = vmatpush1.bf16.msra.mxu0 0
    %978 = vmatprep.subr.bf16.mxu0 0
    %979 = vmatpush1.bf16.msra.mxu0 0
    %980 = vmatprep.subr.bf16.mxu0 0
    %981 = vmatpush1.bf16.msra.mxu0 0
    %982 = vmatprep.subr.bf16.mxu0 0
    %983 = vmatpush1.bf16.msra.mxu0 0
    %984 = vmatprep.subr.bf16.mxu0 0
    %985 = vmatpush1.bf16.msra.mxu0 0
    %986 = vmatprep.mubr.bf16.mxu0 0
    %987 = vmatmul.mubr.bf16.gmra.mrb[0].mxu0 %v952
    %v988 = vpop.f32.mrb[0].mxu0
    %v989 = vadd.f32 0.0, %v988
    %v990 = vpop.f32.mrb[0].mxu0
    %v991 = vpop.f32.mrb[0].mxu0
    %v992 = vpop.f32.mrb[0].mxu0
    %993 = vdwg.mxu0
    %v995 = vrot.slane %v989, 3
    %v996 = vrot.slane %v989, 4
    %v999 = vadd.f32 %v357, %v995
    %v1000 = vadd.f32 %v360, %v996
    %v1001 = vxor.u32 %v999, 2147483648
    %v1002 = vxor.u32 %v1000, 2147483648
    %v1003 = vmul.f32 %v1001, 1.442695
    %v1004 = vpow.pop %v1003
    %v1005 = vmul.f32 %v1002, 1.442695
    %v1006 = vpow.pop %v1005
    %v1007 = vadd.f32 %v1004, 1.0
    %v1008 = vadd.f32 %v1006, 1.0
    %v1009 = vrcp.pop %v1007
    %v1010 = vmul.f32 1.0, %v1009
    %v1011 = vrcp.pop %v1008
    %v1012 = vmul.f32 1.0, %v1011
    %v1013 = vmul.f32 %v1010, 2.0
    %v1014 = vmul.f32 %v1012, 2.0
    %v1015 = vsub.f32 %v1013, 1.0
    %v1016 = vsub.f32 %v1014, 1.0
    %v1019 = vrot.slane %v925, 7
    %v1020 = vrot.slane %v926, 7
    %v1023 = vmul.f32 %v1010, %v1019
    %v1024 = vmul.f32 %v1012, %v1020
    %1027 = vrot.lane.b32.xlu0 %v1015, 64
    %v1028 = vpop.permute.xlu0 %1027
    %1029 = vrot.lane.b32.xlu0 %v1016, 64
    %v1030 = vpop.permute.xlu0 %1029
    %v1033 = vmul.f32 %v1010, %v1028
    %v1034 = vmul.f32 %v1012, %v1030
    %1037 = vrot.lane.b32.xlu0 %v1033, 32
    %v1038 = vpop.permute.xlu0 %1037
    %1039 = vrot.lane.b32.xlu0 %v1034, 32
    %v1040 = vpop.permute.xlu0 %1039
    %v1043 = vadd.f32 %v1023, %v1038
    %v1044 = vadd.f32 %v1024, %v1040
    %v1045 = vtanh.pop %v1043
    %v1046 = vtanh.pop %v1044
    %1049 = vrot.lane.b32.xlu0 %v1045, 64
    %v1050 = vpop.permute.xlu0 %1049
    %1051 = vrot.lane.b32.xlu0 %v1046, 64
    %v1052 = vpop.permute.xlu0 %1051
    %v1055 = vmul.f32 %v1010, %v1050
    %v1056 = vmul.f32 %v1012, %v1052
    %v1057 = vpack.c.bf16 %v1055, %v1055
    %v1058 = vpack.c.bf16 %v1056, %v1056
    %v1061 = vunpack.c.l.b16 %v1057
    %v1062 = vunpack.c.l.b16 %v1058
    %v1063 = vrot.slane %v1061, 5
    %v1064 = vrot.slane %v1062, 4
    %v1065 = vsel %vm476, %v1064, %v1063
    %v1066 = vpack.c.b16 %v1065, %v1065
    %1067 = vrot.lane.b32.xlu0 %v1066, 32
    %v1068 = vpop.permute.xlu0 %1067
    %v1070 = vsel %vm369, %v1068, 0
    %1072 = vmatprep.subr.bf16.mxu0 0
    %1073 = vmatpush1.bf16.msra.mxu0 %v367
    %1074 = vmatprep.subr.bf16.mxu0 0
    %1075 = vmatpush1.bf16.msra.mxu0 %v368
    %1076 = vmatprep.subr.bf16.mxu0 0
    %1077 = vmatpush1.bf16.msra.mxu0 0
    %1078 = vmatprep.subr.bf16.mxu0 0
    %1079 = vmatpush1.bf16.msra.mxu0 0
    %1080 = vmatprep.subr.bf16.mxu0 0
    %1081 = vmatpush1.bf16.msra.mxu0 0
    %1082 = vmatprep.subr.bf16.mxu0 0
    %1083 = vmatpush1.bf16.msra.mxu0 0
    %1084 = vmatprep.subr.bf16.mxu0 0
    %1085 = vmatpush1.bf16.msra.mxu0 0
    %1086 = vmatprep.subr.bf16.mxu0 0
    %1087 = vmatpush1.bf16.msra.mxu0 0
    %1088 = vmatprep.subr.bf16.mxu0 0
    %1089 = vmatpush1.bf16.msra.mxu0 0
    %1090 = vmatprep.subr.bf16.mxu0 0
    %1091 = vmatpush1.bf16.msra.mxu0 0
    %1092 = vmatprep.subr.bf16.mxu0 0
    %1093 = vmatpush1.bf16.msra.mxu0 0
    %1094 = vmatprep.subr.bf16.mxu0 0
    %1095 = vmatpush1.bf16.msra.mxu0 0
    %1096 = vmatprep.subr.bf16.mxu0 0
    %1097 = vmatpush1.bf16.msra.mxu0 0
    %1098 = vmatprep.subr.bf16.mxu0 0
    %1099 = vmatpush1.bf16.msra.mxu0 0
    %1100 = vmatprep.subr.bf16.mxu0 0
    %1101 = vmatpush1.bf16.msra.mxu0 0
    %1102 = vmatprep.subr.bf16.mxu0 0
    %1103 = vmatpush1.bf16.msra.mxu0 0
    %1104 = vmatprep.mubr.bf16.mxu0 0
    %1105 = vmatmul.mubr.bf16.gmra.mrb[0].mxu0 %v1070
    %v1106 = vpop.f32.mrb[0].mxu0
    %v1107 = vadd.f32 0.0, %v1106
    %v1108 = vpop.f32.mrb[0].mxu0
    %v1109 = vpop.f32.mrb[0].mxu0
    %v1110 = vpop.f32.mrb[0].mxu0
    %1111 = vdwg.mxu0
    %v1113 = vrot.slane %v1107, 2
    %v1114 = vrot.slane %v1107, 3
    %v1117 = vadd.f32 %v357, %v1113
    %v1118 = vadd.f32 %v360, %v1114
    %v1119 = vxor.u32 %v1117, 2147483648
    %v1120 = vxor.u32 %v1118, 2147483648
    %v1121 = vmul.f32 %v1119, 1.442695
    %v1122 = vpow.pop %v1121
    %v1123 = vmul.f32 %v1120, 1.442695
    %v1124 = vpow.pop %v1123
    %v1125 = vadd.f32 %v1122, 1.0
    %v1126 = vadd.f32 %v1124, 1.0
    %v1127 = vrcp.pop %v1125
    %v1128 = vmul.f32 1.0, %v1127
    %v1129 = vrcp.pop %v1126
    %v1130 = vmul.f32 1.0, %v1129
    %v1131 = vmul.f32 %v1128, 2.0
    %v1132 = vmul.f32 %v1130, 2.0
    %v1133 = vsub.f32 %v1131, 1.0
    %v1134 = vsub.f32 %v1132, 1.0
    %v1137 = vrot.slane %v1043, 7
    %v1138 = vrot.slane %v1044, 7
    %v1141 = vmul.f32 %v1128, %v1137
    %v1142 = vmul.f32 %v1130, %v1138
    %1145 = vrot.lane.b32.xlu0 %v1133, 64
    %v1146 = vpop.permute.xlu0 %1145
    %1147 = vrot.lane.b32.xlu0 %v1134, 64
    %v1148 = vpop.permute.xlu0 %1147
    %v1151 = vmul.f32 %v1128, %v1146
    %v1152 = vmul.f32 %v1130, %v1148
    %1155 = vrot.lane.b32.xlu0 %v1151, 32
    %v1156 = vpop.permute.xlu0 %1155
    %1157 = vrot.lane.b32.xlu0 %v1152, 32
    %v1158 = vpop.permute.xlu0 %1157
    %v1161 = vadd.f32 %v1141, %v1156
    %v1162 = vadd.f32 %v1142, %v1158
    %v1163 = vtanh.pop %v1161
    %v1164 = vtanh.pop %v1162
    %1167 = vrot.lane.b32.xlu0 %v1163, 64
    %v1168 = vpop.permute.xlu0 %1167
    %1169 = vrot.lane.b32.xlu0 %v1164, 64
    %v1170 = vpop.permute.xlu0 %1169
    %v1173 = vmul.f32 %v1128, %v1168
    %v1174 = vmul.f32 %v1130, %v1170
    %v1175 = vpack.c.bf16 %v1173, %v1173
    %v1176 = vpack.c.bf16 %v1174, %v1174
    %v1179 = vunpack.c.l.b16 %v1175
    %v1180 = vunpack.c.l.b16 %v1176
    %v1181 = vrot.slane %v1179, 6
    %v1182 = vrot.slane %v1180, 5
    %v1183 = vsel %vm476, %v1182, %v1181
    %v1184 = vpack.c.b16 %v1183, %v1183
    %1185 = vrot.lane.b32.xlu0 %v1184, 32
    %v1186 = vpop.permute.xlu0 %1185
    %v1188 = vsel %vm369, %v1186, 0
    %1190 = vmatprep.subr.bf16.mxu0 0
    %1191 = vmatpush1.bf16.msra.mxu0 %v367
    %1192 = vmatprep.subr.bf16.mxu0 0
    %1193 = vmatpush1.bf16.msra.mxu0 %v368
    %1194 = vmatprep.subr.bf16.mxu0 0
    %1195 = vmatpush1.bf16.msra.mxu0 0
    %1196 = vmatprep.subr.bf16.mxu0 0
    %1197 = vmatpush1.bf16.msra.mxu0 0
    %1198 = vmatprep.subr.bf16.mxu0 0
    %1199 = vmatpush1.bf16.msra.mxu0 0
    %1200 = vmatprep.subr.bf16.mxu0 0
    %1201 = vmatpush1.bf16.msra.mxu0 0
    %1202 = vmatprep.subr.bf16.mxu0 0
    %1203 = vmatpush1.bf16.msra.mxu0 0
    %1204 = vmatprep.subr.bf16.mxu0 0
    %1205 = vmatpush1.bf16.msra.mxu0 0
    %1206 = vmatprep.subr.bf16.mxu0 0
    %1207 = vmatpush1.bf16.msra.mxu0 0
    %1208 = vmatprep.subr.bf16.mxu0 0
    %1209 = vmatpush1.bf16.msra.mxu0 0
    %1210 = vmatprep.subr.bf16.mxu0 0
    %1211 = vmatpush1.bf16.msra.mxu0 0
    %1212 = vmatprep.subr.bf16.mxu0 0
    %1213 = vmatpush1.bf16.msra.mxu0 0
    %1214 = vmatprep.subr.bf16.mxu0 0
    %1215 = vmatpush1.bf16.msra.mxu0 0
    %1216 = vmatprep.subr.bf16.mxu0 0
    %1217 = vmatpush1.bf16.msra.mxu0 0
    %1218 = vmatprep.subr.bf16.mxu0 0
    %1219 = vmatpush1.bf16.msra.mxu0 0
    %1220 = vmatprep.subr.bf16.mxu0 0
    %1221 = vmatpush1.bf16.msra.mxu0 0
    %1222 = vmatprep.mubr.bf16.mxu0 0
    %1223 = vmatmul.mubr.bf16.gmra.mrb[0].mxu0 %v1188
    %v1224 = vpop.f32.mrb[0].mxu0
    %v1225 = vadd.f32 0.0, %v1224
    %v1226 = vpop.f32.mrb[0].mxu0
    %v1227 = vpop.f32.mrb[0].mxu0
    %v1228 = vpop.f32.mrb[0].mxu0
    %1229 = vdwg.mxu0
    %v1231 = vrot.slane %v1225, 1
    %v1232 = vrot.slane %v1225, 2
    %v1235 = vadd.f32 %v357, %v1231
    %v1236 = vadd.f32 %v360, %v1232
    %v1237 = vxor.u32 %v1235, 2147483648
    %v1238 = vxor.u32 %v1236, 2147483648
    %v1239 = vmul.f32 %v1237, 1.442695
    %v1240 = vpow.pop %v1239
    %v1241 = vmul.f32 %v1238, 1.442695
    %v1242 = vpow.pop %v1241
    %v1243 = vadd.f32 %v1240, 1.0
    %v1244 = vadd.f32 %v1242, 1.0
    %v1245 = vrcp.pop %v1243
    %v1246 = vmul.f32 1.0, %v1245
    %v1247 = vrcp.pop %v1244
    %v1248 = vmul.f32 1.0, %v1247
    %v1249 = vmul.f32 %v1246, 2.0
    %v1250 = vmul.f32 %v1248, 2.0
    %v1251 = vsub.f32 %v1249, 1.0
    %v1252 = vsub.f32 %v1250, 1.0
    %v1255 = vrot.slane %v1161, 7
    %v1256 = vrot.slane %v1162, 7
    %v1259 = vmul.f32 %v1246, %v1255
    %v1260 = vmul.f32 %v1248, %v1256
    %1263 = vrot.lane.b32.xlu0 %v1251, 64
    %v1264 = vpop.permute.xlu0 %1263
    %1265 = vrot.lane.b32.xlu0 %v1252, 64
    %v1266 = vpop.permute.xlu0 %1265
    %v1269 = vmul.f32 %v1246, %v1264
    %v1270 = vmul.f32 %v1248, %v1266
    %1273 = vrot.lane.b32.xlu0 %v1269, 32
    %v1274 = vpop.permute.xlu0 %1273
    %1275 = vrot.lane.b32.xlu0 %v1270, 32
    %v1276 = vpop.permute.xlu0 %1275
    %v1279 = vadd.f32 %v1259, %v1274
    %v1280 = vadd.f32 %v1260, %v1276
    %v1281 = vtanh.pop %v1279
    %v1282 = vtanh.pop %v1280
    %1285 = vrot.lane.b32.xlu0 %v1281, 64
    %v1286 = vpop.permute.xlu0 %1285
    %1287 = vrot.lane.b32.xlu0 %v1282, 64
    %v1288 = vpop.permute.xlu0 %1287
    %v1291 = vmul.f32 %v1246, %v1286
    %v1292 = vmul.f32 %v1248, %v1288
    %v1293 = vld [vmem:[#allocation2 + $0x48] sm:$0xff]
    %v1294 = vld [vmem:[#allocation2 + $0x50] sm:$0xff]
    %v1295 = vld [vmem:[#allocation2 + $0x58] sm:$0xff]
    %v1296 = vld [vmem:[#allocation2 + $0x60] sm:$0xff]
    %v1297 = vpack.c.bf16 %v1294, %v1293
    %v1298 = vpack.c.bf16 %v1296, %v1295
    %v1299 = vld [vmem:[#allocation2 + $0x68] sm:$0x1]
    %v1300 = vld [vmem:[#allocation2 + $0x69] sm:$0x1]
    %v1301 = vld [vmem:[#allocation2 + $0x6a] sm:$0x1]
    %v1302 = vld [vmem:[#allocation2 + $0x70] sm:$0xff]
    %v1303 = vld [vmem:[#allocation2 + $0x78] sm:$0xff]
    %v1304 = vld [vmem:[#allocation2 + $0x80] sm:$0xff]
    %v1305 = vld [vmem:[#allocation2 + $0x88] sm:$0xff]
    %v1306 = vpack.c.bf16 %v1303, %v1302
    %v1307 = vpack.c.bf16 %v1305, %v1304
    %v1308 = vld [vmem:[#allocation2 + $0x6b] sm:$0x1]
    %v1309 = vpack.c.bf16 %v1291, %v1291
    %v1310 = vpack.c.bf16 %v1292, %v1292
    %v1311 = vlaneseq
    %v1312 = vshrl.u32 %v1311, 7
    %v1313 = vsub.s32 0, %v1312
    %v1314 = vrot.slane %v1299, %v1313
    %v1317 = vunpack.c.l.b16 %v1309
    %v1318 = vunpack.c.l.b16 %v1310
    %v1319 = vrot.slane %v1317, 7
    %v1320 = vrot.slane %v1318, 6
    %v1321 = vsel %vm476, %v1320, %v1319
    %v1322 = vpack.c.b16 %v1321, %v1321
    %1323 = vrot.lane.b32.xlu0 %v1322, 32
    %v1324 = vpop.permute.xlu0 %1323
    %v1326 = vsel %vm369, %v1324, 0
    %1328 = vmatprep.subr.bf16.mxu0 0
    %1329 = vmatpush1.bf16.msra.mxu0 %v1297
    %1330 = vmatprep.subr.bf16.mxu0 0
    %1331 = vmatpush1.bf16.msra.mxu0 %v1298
    %1332 = vmatprep.subr.bf16.mxu0 0
    %1333 = vmatpush1.bf16.msra.mxu0 0
    %1334 = vmatprep.subr.bf16.mxu0 0
    %1335 = vmatpush1.bf16.msra.mxu0 0
    %1336 = vmatprep.subr.bf16.mxu0 0
    %1337 = vmatpush1.bf16.msra.mxu0 0
    %1338 = vmatprep.subr.bf16.mxu0 0
    %1339 = vmatpush1.bf16.msra.mxu0 0
    %1340 = vmatprep.subr.bf16.mxu0 0
    %1341 = vmatpush1.bf16.msra.mxu0 0
    %1342 = vmatprep.subr.bf16.mxu0 0
    %1343 = vmatpush1.bf16.msra.mxu0 0
    %1344 = vmatprep.subr.bf16.mxu0 0
    %1345 = vmatpush1.bf16.msra.mxu0 0
    %1346 = vmatprep.subr.bf16.mxu0 0
    %1347 = vmatpush1.bf16.msra.mxu0 0
    %1348 = vmatprep.subr.bf16.mxu0 0
    %1349 = vmatpush1.bf16.msra.mxu0 0
    %1350 = vmatprep.subr.bf16.mxu0 0
    %1351 = vmatpush1.bf16.msra.mxu0 0
    %1352 = vmatprep.subr.bf16.mxu0 0
    %1353 = vmatpush1.bf16.msra.mxu0 0
    %1354 = vmatprep.subr.bf16.mxu0 0
    %1355 = vmatpush1.bf16.msra.mxu0 0
    %1356 = vmatprep.subr.bf16.mxu0 0
    %1357 = vmatpush1.bf16.msra.mxu0 0
    %1358 = vmatprep.subr.bf16.mxu0 0
    %1359 = vmatpush1.bf16.msra.mxu0 0
    %1360 = vmatprep.mubr.bf16.mxu0 0
    %1361 = vmatmul.mubr.bf16.gmra.mrb[0].mxu0 %v1326
    %v1362 = vpop.f32.mrb[0].mxu0
    %v1363 = vadd.f32 %v1314, %v1362
    %v1364 = vpop.f32.mrb[0].mxu0
    %v1365 = vpop.f32.mrb[0].mxu0
    %v1366 = vpop.f32.mrb[0].mxu0
    %1367 = vdwg.mxu0
    %vm1368 = vcmask 254976
    %v1369 = vsel %vm1368, %v1363, 0.0
    %1370 = vadd.xlane.f32.xlu0 %v1369
    %v1371 = vpop.xlane.xlu0 %1370
    %v1372 = vrcp.pop 32.0
    %v1373 = vmul.f32 %v1371, %v1372
    %v1374 = vsub.f32 %v1363, %v1373
    %v1375 = vmul.f32 %v1374, %v1374
    %v1376 = vsel %vm1368, %v1375, 0.0
    %1377 = vadd.xlane.f32.xlu0 %v1376
    %v1378 = vpop.xlane.xlu0 %1377
    %v1379 = vmul.f32 %v1378, %v1372
    %v1380 = vadd.f32 %v1379, 1e-05
    %v1381 = vrsqrt.pop %v1380
    %v1382 = vmul.f32 %v1374, %v1381
    %v1383 = vlaneseq
    %v1384 = vshrl.u32 %v1383, 7
    %v1385 = vsub.s32 0, %v1384
    %v1386 = vrot.slane %v1300, %v1385
    %v1387 = vmul.f32 %v1382, %v1386
    %v1388 = vlaneseq
    %v1389 = vshrl.u32 %v1388, 7
    %v1390 = vsub.s32 0, %v1389
    %v1391 = vrot.slane %v1301, %v1390
    %v1392 = vadd.f32 %v1387, %v1391
    %v1393 = vmul.f32 %v1392, 0.5
    %v1394 = vmul.f32 %v1392, 0.044715
    %v1395 = vmul.f32 %v1394, %v1392
    %v1396 = vmul.f32 %v1395, %v1392
    %v1397 = vadd.f32 %v1392, %v1396
    %v1398 = vmul.f32 %v1397, 0.7978846
    %v1399 = vtanh.pop %v1398
    %v1400 = vadd.f32 %v1399, 1.0
    %v1401 = vmul.f32 %v1393, %v1400
    %v1402 = vpack.c.bf16 %v1401, %v1401
    %v1403 = vlaneseq
    %v1404 = vshrl.u32 %v1403, 7
    %v1405 = vsub.s32 0, %v1404
    %v1406 = vrot.slane %v1308, %v1405
    %v1408 = vsel %vm369, %v1402, 0
    %1410 = vmatprep.subr.bf16.mxu0 0
    %1411 = vmatpush1.bf16.msra.mxu0 %v1306
    %1412 = vmatprep.subr.bf16.mxu0 0
    %1413 = vmatpush1.bf16.msra.mxu0 %v1307
    %1414 = vmatprep.subr.bf16.mxu0 0
    %1415 = vmatpush1.bf16.msra.mxu0 0
    %1416 = vmatprep.subr.bf16.mxu0 0
    %1417 = vmatpush1.bf16.msra.mxu0 0
    %1418 = vmatprep.subr.bf16.mxu0 0
    %1419 = vmatpush1.bf16.msra.mxu0 0
    %1420 = vmatprep.subr.bf16.mxu0 0
    %1421 = vmatpush1.bf16.msra.mxu0 0
    %1422 = vmatprep.subr.bf16.mxu0 0
    %1423 = vmatpush1.bf16.msra.mxu0 0
    %1424 = vmatprep.subr.bf16.mxu0 0
    %1425 = vmatpush1.bf16.msra.mxu0 0
    %1426 = vmatprep.subr.bf16.mxu0 0
    %1427 = vmatpush1.bf16.msra.mxu0 0
    %1428 = vmatprep.subr.bf16.mxu0 0
    %1429 = vmatpush1.bf16.msra.mxu0 0
    %1430 = vmatprep.subr.bf16.mxu0 0
    %1431 = vmatpush1.bf16.msra.mxu0 0
    %1432 = vmatprep.subr.bf16.mxu0 0
    %1433 = vmatpush1.bf16.msra.mxu0 0
    %1434 = vmatprep.subr.bf16.mxu0 0
    %1435 = vmatpush1.bf16.msra.mxu0 0
    %1436 = vmatprep.subr.bf16.mxu0 0
    %1437 = vmatpush1.bf16.msra.mxu0 0
    %1438 = vmatprep.subr.bf16.mxu0 0
    %1439 = vmatpush1.bf16.msra.mxu0 0
    %1440 = vmatprep.subr.bf16.mxu0 0
    %1441 = vmatpush1.bf16.msra.mxu0 0
    %1442 = vmatprep.mubr.bf16.mxu0 0
    %1443 = vmatmul.mubr.bf16.gmra.mrb[0].mxu0 %v1408
    %v1444 = vpop.f32.mrb[0].mxu0
    %v1445 = vadd.f32 %v1406, %v1444
    %v1446 = vpop.f32.mrb[0].mxu0
    %v1447 = vpop.f32.mrb[0].mxu0
    %v1448 = vpop.f32.mrb[0].mxu0
    %1449 = vdwg.mxu0
    %vm1450 = vcmask 25600
    %1451 = vst.msk [vmem:[#allocation5] sm:$0x3] %vm1450, %v1445
    // Predicated region
    $region14: #{cnn_lstm_forward.1} parent=1 // pred_check
      _
    $region15: #{cnn_lstm_forward.1} parent=1 // pred_check_branch
      %1453 = sbr.rel (0) target = $region17
    $region16: #{cnn_lstm_forward.1} parent=1 // pred_region
      %s1455 = ssub.s32 32, 32
      %1456 = vsyncadd [#allocation4], %s1455
      %s1458 = sshll.u32 [#allocation5], 4
      %s1459 = int_to_ptr.vmem [resolvable:$true] %s1458
      %1461 = dma.vmem_to_hbm [thread:$0]  %s1459, 32, %s2, [#allocation4]
    $region17: #{cnn_lstm_forward.1} parent=1 // pred_fallthru
      _
    // Predicated region
    $region18: #{cnn_lstm_forward.1} parent=1 // pred_check
      _
    $region19: #{cnn_lstm_forward.1} parent=1 // pred_check_branch
      %1463 = sbr.rel (0) target = $region21
    $region20: #{cnn_lstm_forward.1} parent=1 // pred_region
      %1464 = dma.done [#allocation4], 32
    $region21: #{cnn_lstm_forward.1} parent=1 // pred_fallthru
      _
    %1465 = vsyncpa [#allocation3], 1
    %1466 = vsyncpa [#allocation4], 1

</llo_original>
